<compile_context>
chip_gen: v5e
topology: v5e:2x2
jax: 0.10.0
libtpu: 0.0.40
codegen_flags: <defaults>
</compile_context>

<pallas_src>
import numpy as np
import jax
import jax.numpy as jnp
from jax.experimental import pallas as pl
from jax.experimental.pallas import tpu as pltpu

BN_EPS = 1e-5
RATIO_GIN = 0.5
RATIO_GOUT = 0.5
IN_CH = 16
OUT_CH = 16
OUT_CG = int(OUT_CH * RATIO_GOUT)      # 8 global output channels
OUT_CL = OUT_CH - OUT_CG               # 8 local output channels


# ----------------------------------------------------------------------------
# Static (parameter-independent) matrices: DFTs, quadrant selection, tiling
# Column layout everywhere: (h, w) with w fastest (== contiguous NCHW).
# ----------------------------------------------------------------------------
def _dft_mats(F):
    """rfft / irfft (norm='ortho') along an axis of length F as real matrices."""
    Fh = F // 2 + 1
    k = np.arange(Fh, dtype=np.float64)[:, None]
    h = np.arange(F, dtype=np.float64)[None, :]
    ang = 2.0 * np.pi * k * h / F
    sc = 1.0 / np.sqrt(F)
    r_re = np.cos(ang) * sc                       # (Fh, F)
    r_im = -np.sin(ang) * sc
    wgt = np.full((Fh,), 2.0)
    wgt[0] = 1.0
    wgt[-1] = 1.0                                 # DC / Nyquist counted once
    hh = np.arange(F, dtype=np.float64)[:, None]
    kk = np.arange(Fh, dtype=np.float64)[None, :]
    ang2 = 2.0 * np.pi * hh * kk / F
    i_re = wgt[None, :] * np.cos(ang2) * sc       # (F, Fh)
    i_im = -wgt[None, :] * np.sin(ang2) * sc
    return r_re, r_im, i_re, i_im


def _quadrant_select_mats(H, W):
    """(4, H*W, (H/2)*(W/2)) 0/1 matrices picking the LFU quadrants.

    Columns of s are (h, w) [w fastest]; columns of xs are (h', w').
    Channel order matches torch's split/cat: [(h<H/2,w<W/2), (h>=,w<),
    (h<,w>=), (h>=,w>=)].
    """
    h2, w2 = H // 2, W // 2
    offs = [(0, 0), (h2, 0), (0, w2), (h2, w2)]           # (h_off, w_off)
    mats = np.zeros((4, H * W, h2 * w2), np.float32)
    for q, (h0, w0) in enumerate(offs):
        for hp in range(h2):
            for wp in range(w2):
                mats[q, (h0 + hp) * W + (w0 + wp), hp * w2 + wp] = 1.0
    return mats


def _lfu_row_place_mats(B, C=4):
    """(4, C*B, C*B) matrices placing s channel-0 rows into LFU channel q rows.

    Row layout is (batch, channel): row = b*C + c.
    """
    n = C * B
    mats = np.zeros((4, n, n), np.float32)
    for q in range(4):
        for b in range(B):
            mats[q, b * C + q, b * C + 0] = 1.0
    return mats


def _tile_repeat_mat(H, W):
    """(H/2*W/2, H*W) 0/1 matrix implementing .repeat(1,1,2,2) on columns."""
    h2, w2 = H // 2, W // 2
    t = np.zeros((h2 * w2, H * W), np.float32)
    for h in range(H):
        for w in range(W):
            t[(h % h2) * w2 + (w % w2), h * W + w] = 1.0
    return t


# ----------------------------------------------------------------------------
# Parameter folding (once, outside the hot path)
# ----------------------------------------------------------------------------
def fold_params(p, B=2, H=16, W=16):
    """Fold BN into weights and build all constant matrices for the kernel.

    Bakes B, H, W and the 0.5/0.5 channel split into the constants.
    Activation layout: rows = (batch, channel), cols = (h, w).
    """
    f32 = jnp.float32
    I_B = jnp.eye(B, dtype=f32)

    def bn_fold(bn):
        scale = bn["gamma"] / jnp.sqrt(bn["var"] + BN_EPS)
        bias = bn["beta"] - bn["mean"] * scale
        return scale, bias

    def kron_b(w):                       # (B*Cout, B*Cin), rows = b*Cout + co
        return jnp.kron(I_B, w.astype(f32))

    def rep_b(v):                        # (B*C, 1), row b*C + c -> v[c]
        return jnp.tile(v.astype(f32), B)[:, None]

    st = p["st"]
    scale_l, bias_l = bn_fold(p["bn_l"])
    scale_g, bias_g = bn_fold(p["bn_g"])
    scale1, bias1 = bn_fold(st["bn1"])

    # All input-side 1x1 convs stacked into two matrices (one per input half):
    #   k_inL @ x_l : rows [0:16] = bn_l-scaled convl2l, rows [16:32] = bn_g-scaled convl2g
    #   k_inG @ x_g : rows [0:16] = bn_l-scaled convg2l, rows [16:24] = bn1-scaled conv1
    k_inL = jnp.concatenate([kron_b(scale_l[:, None] * p["w_l2l"]),
                             kron_b(scale_g[:, None] * p["w_l2g"])], axis=0)   # (32, 16)
    k_inG = jnp.concatenate([kron_b(scale_l[:, None] * p["w_g2l"]),
                             kron_b(scale1[:, None] * st["conv1_w"])], axis=0)  # (24, 16)

    # FourierUnit 1x1 conv, torch-interleaved channels [c0_re, c0_im, ...]
    def fu_blocks(fu):
        scale, bias = bn_fold(fu["bn"])
        wc = fu["w"]                                                  # (2C, 2C)
        s_re, s_im = scale[0::2][:, None], scale[1::2][:, None]
        blocks = jnp.stack([
            kron_b(s_re * wc[0::2, 0::2]), kron_b(s_re * wc[0::2, 1::2]),
            kron_b(s_im * wc[1::2, 0::2]), kron_b(s_im * wc[1::2, 1::2]),
        ])                                                            # (4, 8, 8)
        return blocks, rep_b(bias[0::2]), rep_b(bias[1::2])

    w_fu, b_fu_re, b_fu_im = fu_blocks(st["fu"])
    w_lfu, b_lfu_re, b_lfu_im = fu_blocks(st["lfu"])

    # conv2 with bn_g folded (bias added once in the kernel)
    k_conv2 = kron_b(scale_g[:, None] * st["conv2_w"])                # (16, 8)

    # all biases packed into one lane-1 column vector (offsets multiples of 8)
    b_all = jnp.concatenate([
        rep_b(bias_l),            # [ 0:16]  bn_l
        rep_b(bias1),             # [16:24]  bn1
        b_fu_re, b_fu_im,         # [24:32], [32:40]
        b_lfu_re, b_lfu_im,       # [40:48], [48:56]
        rep_b(bias_g),            # [56:72]  bn_g
    ], axis=0)                    # (72, 1)

    # static DFT / selection / tiling matrices (cols = (h, w), w fastest)
    r_re, r_im, i_re, i_im = _dft_mats(H)             # fu: F = H = 16
    I_W = np.eye(W)
    k_rfft = np.stack([np.kron(r_re.T, I_W),          # (2, H*W, Fh*W) = (2,256,144)
                       np.kron(r_im.T, I_W)])
    k_irfft = np.stack([np.kron(i_re.T, I_W),         # (2, Fh*W, H*W) = (2,144,256)
                        np.kron(i_im.T, I_W)])

    h2, w2 = H // 2, W // 2                           # lfu: F = 8, spatial 8x8
    lr_re, lr_im, li_re, li_im = _dft_mats(h2)
    I_w2 = np.eye(w2)
    s_sel = _quadrant_select_mats(H, W)               # (4, 256, 64)
    l_sel = _lfu_row_place_mats(B)                    # (4, 8, 8)
    t_rep = _tile_repeat_mat(H, W)                    # (64, 256)
    k_lrfft = np.stack([np.kron(lr_re.T, I_w2),       # (2, 64, 40)
                        np.kron(lr_im.T, I_w2)])
    k_lirfft = np.stack([np.kron(li_re.T, I_w2) @ t_rep,   # irfft + 2x2 tile
                         np.kron(li_im.T, I_w2) @ t_rep])  # (2, 40, 256)

    asf = lambda a: jnp.asarray(a, f32)
    return (k_inL, k_inG, asf(k_rfft), w_fu, asf(k_irfft),
            asf(s_sel), asf(l_sel), asf(k_lrfft), w_lfu, asf(k_lirfft),
            k_conv2, b_all)


# ----------------------------------------------------------------------------
# The single fused Pallas kernel
# ----------------------------------------------------------------------------
def _ffc_kernel(
    xl_ref, xg_ref,                         # (16, 256), (16, 256)
    k_inL_ref, k_inG_ref,                   # (32, 16), (24, 16)
    k_rfft_ref,                             # (2, 256, 144)
    w_fu_ref,                               # (4, 8, 8)
    k_irfft_ref,                             # (2, 144, 256)
    s_sel_ref, l_sel_ref,                   # (4, 256, 64), (4, 8, 8)
    k_lrfft_ref,                            # (2, 64, 40)
    w_lfu_ref,                              # (4, 8, 8)
    k_lirfft_ref,                           # (2, 40, 256)
    k_conv2_ref,                            # (16, 8)
    b_ref,                                  # (72, 1)
    out_xl_ref, out_xg_ref,                 # (16, 256) x2
):
    dot = lambda a, b: jnp.dot(a, b, preferred_element_type=jnp.float32)
    relu = lambda v: jnp.maximum(v, 0.0)

    x_l = xl_ref[...]                       # rows = (batch, channel), cols = (h, w)
    x_g = xg_ref[...]
    b = b_ref[...]

    # all input-side 1x1 convs (with BN scales folded) as two stacked matmuls
    yl = dot(k_inL_ref[...], x_l)           # [0:16] l2l, [16:32] l2g
    yg = dot(k_inG_ref[...], x_g)           # [0:16] g2l, [16:24] conv1

    # local branch: bn_l(convl2l(x_l) + convg2l(x_g)),  act = Identity
    out_xl_ref[...] = yl[:16] + yg[:16] + b[0:16]

    # SpectralTransform.conv1 + BN + ReLU
    s = relu(yg[16:24] + b[16:24])                                       # (8, 256)

    # ---- FourierUnit (fu): rfft_H -> 1x1 conv + BN + ReLU -> irfft_H -------
    sp_re = dot(s, k_rfft_ref[0])                                        # (8, 144)
    sp_im = dot(s, k_rfft_ref[1])
    y_re = relu(dot(w_fu_ref[0], sp_re) + dot(w_fu_ref[1], sp_im) + b[24:32])
    y_im = relu(dot(w_fu_ref[2], sp_re) + dot(w_fu_ref[3], sp_im) + b[32:40])
    fu_out = dot(y_re, k_irfft_ref[0]) + dot(y_im, k_irfft_ref[1])       # (8, 256)

    # ---- LFU: quadrant split of s channel 0 -> FourierUnit -> 2x2 tile -----
    xs = dot(l_sel_ref[0], dot(s, s_sel_ref[0]))                         # (8, 64)
    for q in range(1, 4):
        xs = xs + dot(l_sel_ref[q], dot(s, s_sel_ref[q]))
    lp_re = dot(xs, k_lrfft_ref[0])                                      # (8, 40)
    lp_im = dot(xs, k_lrfft_ref[1])
    yl_re = relu(dot(w_lfu_ref[0], lp_re) + dot(w_lfu_ref[1], lp_im) + b[40:48])
    yl_im = relu(dot(w_lfu_ref[2], lp_re) + dot(w_lfu_ref[3], lp_im) + b[48:56])
    xs_tiled = dot(yl_re, k_lirfft_ref[0]) + dot(yl_im, k_lirfft_ref[1])  # (8, 256)

    # ---- global output: bn_g(convl2g(x_l) + conv2(s + fu + xs)) ------------
    z = s + fu_out + xs_tiled
    out_xg_ref[...] = yl[16:32] + dot(k_conv2_ref[...], z) + b[56:72]


# ----------------------------------------------------------------------------
# Forward wrapper: pure reshapes at entry/exit (NCHW is already the kernel
# layout when flattened), one pallas_call, everything resident in VMEM.
# ----------------------------------------------------------------------------
def ffc_bn_act_forward(x_l, x_g, folded):
    B, Cl, H, W = x_l.shape
    Cg = x_g.shape[1]
    xl_m = x_l.reshape(B * Cl, H * W).astype(jnp.float32)   # free reshape
    xg_m = x_g.reshape(B * Cg, H * W).astype(jnp.float32)

    n_in = 2 + len(folded)
    out_xl_m, out_xg_m = pl.pallas_call(
        _ffc_kernel,
        out_shape=(jax.ShapeDtypeStruct((B * OUT_CL, H * W), jnp.float32),
                   jax.ShapeDtypeStruct((B * OUT_CG, H * W), jnp.float32)),
        in_specs=[pl.BlockSpec(memory_space=pltpu.MemorySpace.VMEM)] * n_in,
        out_specs=(pl.BlockSpec(memory_space=pltpu.MemorySpace.VMEM),
                   pl.BlockSpec(memory_space=pltpu.MemorySpace.VMEM)),
    )(xl_m, xg_m, *folded)

    # free reshapes back to NCHW
    out_xl = out_xl_m.reshape(B, OUT_CL, H, W)
    out_xg = out_xg_m.reshape(B, OUT_CG, H, W)
    return out_xl, out_xg


# ----------------------------------------------------------------------------
# Deterministic parameter construction (shapes from the module __init__)
# ----------------------------------------------------------------------------
def init_params(key):
    in_cg = int(IN_CH * RATIO_GIN)          # 8
    in_cl = IN_CH - in_cg                   # 8
    out_cg = int(OUT_CH * RATIO_GOUT)       # 8
    out_cl = OUT_CH - out_cg                # 8
    half = out_cg // 2                      # 4

    keys = iter(jax.random.split(key, 32))

    def conv_w(cout, cin):
        return jax.random.normal(next(keys), (cout, cin), jnp.float32) / np.sqrt(cin)

    def bn_p(c):
        return dict(
            gamma=1.0 + 0.1 * jax.random.normal(next(keys), (c,), jnp.float32),
            beta=0.1 * jax.random.normal(next(keys), (c,), jnp.float32),
            mean=0.1 * jax.random.normal(next(keys), (c,), jnp.float32),
            var=jax.random.uniform(next(keys), (c,), jnp.float32, 0.5, 1.5),
        )

    return dict(
        w_l2l=conv_w(out_cl, in_cl),
        w_l2g=conv_w(out_cg, in_cl),
        w_g2l=conv_w(out_cl, in_cg),
        st=dict(
            conv1_w=conv_w(half, in_cg),
            bn1=bn_p(half),
            fu=dict(w=conv_w(2 * half, 2 * half), bn=bn_p(2 * half)),
            lfu=dict(w=conv_w(2 * half, 2 * half), bn=bn_p(2 * half)),
            conv2_w=conv_w(out_cg, half),
        ),
        bn_l=bn_p(out_cl),
        bn_g=bn_p(out_cg),
    )


# ----------------------------------------------------------------------------
# Pure-JAX reference (mirrors the torch module; inference-mode BN)
# ----------------------------------------------------------------------------
def _ffc_reference(x_l, x_g, p):
    hi = jax.lax.Precision.HIGHEST

    def bn(x, bnp):
        scale = bnp["gamma"] / jnp.sqrt(bnp["var"] + BN_EPS)
        bias = bnp["beta"] - bnp["mean"] * scale
        return x * scale[None, :, None, None] + bias[None, :, None, None]

    def conv1x1(x, w):
        return jnp.einsum('oi,bihw->bohw', w, x, precision=hi)

    def fourier_unit(x, fu):
        b, c, f, w = x.shape
        sp = jnp.fft.rfft(x, axis=-2, norm='ortho')
        st = jnp.stack([sp.real, sp.imag], axis=-1)
        st = jnp.transpose(st, (0, 1, 4, 2, 3)).reshape(b, 2 * c, f // 2 + 1, w)
        y = jnp.maximum(bn(conv1x1(st, fu["w"]), fu["bn"]), 0.0)
        y = y.reshape(b, c, 2, f // 2 + 1, w)
        comp = y[:, :, 0] + 1j * y[:, :, 1]
        return jnp.fft.irfft(comp, n=f, axis=2, norm='ortho')

    st_p = p["st"]
    x = jnp.concatenate([x_l, x_g], axis=1)
    c_half = x.shape[1] // 2
    xl, xg = x[:, :c_half], x[:, c_half:]

    out_xl = bn(conv1x1(xl, p["w_l2l"]) + conv1x1(xg, p["w_g2l"]), p["bn_l"])

    s = jnp.maximum(bn(conv1x1(xg, st_p["conv1_w"]), st_p["bn1"]), 0.0)
    fu_out = fourier_unit(s, st_p["fu"])
    c = s.shape[1]
    xs = jnp.concatenate(jnp.split(s[:, :c // 4], 2, axis=2), axis=1)
    xs = jnp.concatenate(jnp.split(xs, 2, axis=3), axis=1)
    xs = fourier_unit(xs, st_p["lfu"])
    xs = jnp.tile(xs, (1, 1, 2, 2))
    spec_out = conv1x1(s + fu_out + xs, st_p["conv2_w"])

    out_xg = bn(conv1x1(xl, p["w_l2g"]) + spec_out, p["bn_g"])
    return out_xl, out_xg


if __name__ == "__main__":
    key = jax.random.PRNGKey(0)
    kx1, kx2, kp = jax.random.split(key, 3)
    B, H, W = 2, 16, 16
    x_l = jax.random.normal(kx1, (B, IN_CH // 2, H, W), jnp.float32)
    x_g = jax.random.normal(kx2, (B, IN_CH // 2, H, W), jnp.float32)
    params = init_params(kp)
    folded = fold_params(params, B=B, H=H, W=W)

    forward = jax.jit(ffc_bn_act_forward)
    out_l, out_g = forward(x_l, x_g, folded)
    jax.block_until_ready((out_l, out_g))

    assert out_l.shape == (B, OUT_CL, H, W)
    assert out_g.shape == (B, OUT_CG, H, W)
    assert jnp.all(jnp.isfinite(out_l)) and jnp.all(jnp.isfinite(out_g))

    ref_l, ref_g = jax.jit(_ffc_reference)(x_l, x_g, params)
    err_l = float(jnp.max(jnp.abs(out_l - ref_l)))
    err_g = float(jnp.max(jnp.abs(out_g - ref_g)))
    assert max(err_l, err_g) < 3e-3, (err_l, err_g)

    print("KERNEL_OK")
</pallas_src>

<mosaic_0001>
module attributes {stable_mosaic.version = 11 : i64} {
  func.func @_ffc_kernel(%arg0: memref<16x256xf32, #tpu.memory_space<vmem>>, %arg1: memref<16x256xf32, #tpu.memory_space<vmem>>, %arg2: memref<32x16xf32, #tpu.memory_space<vmem>>, %arg3: memref<24x16xf32, #tpu.memory_space<vmem>>, %arg4: memref<2x256x144xf32, #tpu.memory_space<vmem>>, %arg5: memref<4x8x8xf32, #tpu.memory_space<vmem>>, %arg6: memref<2x144x256xf32, #tpu.memory_space<vmem>>, %arg7: memref<4x256x64xf32, #tpu.memory_space<vmem>>, %arg8: memref<4x8x8xf32, #tpu.memory_space<vmem>>, %arg9: memref<2x64x40xf32, #tpu.memory_space<vmem>>, %arg10: memref<4x8x8xf32, #tpu.memory_space<vmem>>, %arg11: memref<2x40x256xf32, #tpu.memory_space<vmem>>, %arg12: memref<16x8xf32, #tpu.memory_space<vmem>>, %arg13: memref<72x1xf32, #tpu.memory_space<vmem>>, %arg14: memref<16x256xf32, #tpu.memory_space<vmem>>, %arg15: memref<16x256xf32, #tpu.memory_space<vmem>>) attributes {dimension_semantics = [], scalar_prefetch = 0 : i64, scratch_operands = 0 : i64, tpu.core_type = #tpu.core_type<tc>} {
    %c0 = arith.constant 0 : index
    %c0_0 = arith.constant 0 : index
    %0 = vector.load %arg0[%c0, %c0_0] : memref<16x256xf32, #tpu.memory_space<vmem>>, vector<16x256xf32>
    %c0_1 = arith.constant 0 : index
    %c0_2 = arith.constant 0 : index
    %1 = vector.load %arg1[%c0_1, %c0_2] : memref<16x256xf32, #tpu.memory_space<vmem>>, vector<16x256xf32>
    %c0_3 = arith.constant 0 : index
    %c0_4 = arith.constant 0 : index
    %2 = vector.load %arg13[%c0_3, %c0_4] : memref<72x1xf32, #tpu.memory_space<vmem>>, vector<72x1xf32>
    %c0_5 = arith.constant 0 : index
    %c0_6 = arith.constant 0 : index
    %3 = vector.load %arg2[%c0_5, %c0_6] : memref<32x16xf32, #tpu.memory_space<vmem>>, vector<32x16xf32>
    %cst = arith.constant dense<0.000000e+00> : vector<32x256xf32>
    %4 = tpu.matmul %3, %0, %cst {dimension_numbers = #tpu.dot_dimension_numbers<[1], [0], [0], [1], [0, 0, 1, 1], [], []>} : vector<32x16xf32>, vector<16x256xf32>, vector<32x256xf32> -> vector<32x256xf32>
    %c0_7 = arith.constant 0 : index
    %c0_8 = arith.constant 0 : index
    %5 = vector.load %arg3[%c0_7, %c0_8] : memref<24x16xf32, #tpu.memory_space<vmem>>, vector<24x16xf32>
    %cst_9 = arith.constant dense<0.000000e+00> : vector<24x256xf32>
    %6 = tpu.matmul %5, %1, %cst_9 {dimension_numbers = #tpu.dot_dimension_numbers<[1], [0], [0], [1], [0, 0, 1, 1], [], []>} : vector<24x16xf32>, vector<16x256xf32>, vector<24x256xf32> -> vector<24x256xf32>
    %7 = vector.extract_strided_slice %4 {offsets = [0, 0], sizes = [16, 256], strides = [1, 1]} : vector<32x256xf32> to vector<16x256xf32>
    %8 = vector.extract_strided_slice %6 {offsets = [0, 0], sizes = [16, 256], strides = [1, 1]} : vector<24x256xf32> to vector<16x256xf32>
    %9 = arith.addf %7, %8 : vector<16x256xf32>
    %10 = vector.extract_strided_slice %2 {offsets = [0, 0], sizes = [16, 1], strides = [1, 1]} : vector<72x1xf32> to vector<16x1xf32>
    %11 = vector.broadcast %10 : vector<16x1xf32> to vector<16x256xf32>
    %12 = arith.addf %9, %11 : vector<16x256xf32>
    %c0_10 = arith.constant 0 : index
    %c0_11 = arith.constant 0 : index
    %13 = vector.load %arg14[%c0_10, %c0_11] : memref<16x256xf32, #tpu.memory_space<vmem>>, vector<16x256xf32>
    tpu.vector_store %arg14[%c0_10, %c0_11], %12 {strides = array<i32>} : memref<16x256xf32, #tpu.memory_space<vmem>>, vector<16x256xf32>,
    %14 = vector.extract_strided_slice %6 {offsets = [16, 0], sizes = [8, 256], strides = [1, 1]} : vector<24x256xf32> to vector<8x256xf32>
    %15 = vector.extract_strided_slice %2 {offsets = [16, 0], sizes = [8, 1], strides = [1, 1]} : vector<72x1xf32> to vector<8x1xf32>
    %16 = vector.broadcast %15 : vector<8x1xf32> to vector<8x256xf32>
    %17 = arith.addf %14, %16 : vector<8x256xf32>
    %cst_12 = arith.constant 0.000000e+00 : f32
    %18 = vector.broadcast %cst_12 : f32 to vector<8x256xf32>
    %19 = arith.maximumf %17, %18 : vector<8x256xf32>
    %c0_13 = arith.constant 0 : index
    %c0_14 = arith.constant 0 : index
    %c0_15 = arith.constant 0 : index
    %20 = vector.load %arg4[%c0_13, %c0_14, %c0_15] : memref<2x256x144xf32, #tpu.memory_space<vmem>>, vector<1x256x144xf32>
    %21 = vector.shape_cast %20 : vector<1x256x144xf32> to vector<256x144xf32>
    %cst_16 = arith.constant dense<0.000000e+00> : vector<8x144xf32>
    %22 = tpu.matmul %19, %21, %cst_16 {dimension_numbers = #tpu.dot_dimension_numbers<[1], [0], [0], [1], [0, 0, 1, 1], [], []>} : vector<8x256xf32>, vector<256x144xf32>, vector<8x144xf32> -> vector<8x144xf32>
    %c1 = arith.constant 1 : index
    %c0_17 = arith.constant 0 : index
    %c0_18 = arith.constant 0 : index
    %23 = vector.load %arg4[%c1, %c0_17, %c0_18] : memref<2x256x144xf32, #tpu.memory_space<vmem>>, vector<1x256x144xf32>
    %24 = vector.shape_cast %23 : vector<1x256x144xf32> to vector<256x144xf32>
    %cst_19 = arith.constant dense<0.000000e+00> : vector<8x144xf32>
    %25 = tpu.matmul %19, %24, %cst_19 {dimension_numbers = #tpu.dot_dimension_numbers<[1], [0], [0], [1], [0, 0, 1, 1], [], []>} : vector<8x256xf32>, vector<256x144xf32>, vector<8x144xf32> -> vector<8x144xf32>
    %c0_20 = arith.constant 0 : index
    %c0_21 = arith.constant 0 : index
    %c0_22 = arith.constant 0 : index
    %26 = vector.load %arg5[%c0_20, %c0_21, %c0_22] : memref<4x8x8xf32, #tpu.memory_space<vmem>>, vector<1x8x8xf32>
    %27 = vector.shape_cast %26 : vector<1x8x8xf32> to vector<8x8xf32>
    %cst_23 = arith.constant dense<0.000000e+00> : vector<8x144xf32>
    %28 = tpu.matmul %27, %22, %cst_23 {dimension_numbers = #tpu.dot_dimension_numbers<[1], [0], [0], [1], [0, 0, 1, 1], [], []>} : vector<8x8xf32>, vector<8x144xf32>, vector<8x144xf32> -> vector<8x144xf32>
    %c1_24 = arith.constant 1 : index
    %c0_25 = arith.constant 0 : index
    %c0_26 = arith.constant 0 : index
    %29 = vector.load %arg5[%c1_24, %c0_25, %c0_26] : memref<4x8x8xf32, #tpu.memory_space<vmem>>, vector<1x8x8xf32>
    %30 = vector.shape_cast %29 : vector<1x8x8xf32> to vector<8x8xf32>
    %cst_27 = arith.constant dense<0.000000e+00> : vector<8x144xf32>
    %31 = tpu.matmul %30, %25, %cst_27 {dimension_numbers = #tpu.dot_dimension_numbers<[1], [0], [0], [1], [0, 0, 1, 1], [], []>} : vector<8x8xf32>, vector<8x144xf32>, vector<8x144xf32> -> vector<8x144xf32>
    %32 = arith.addf %28, %31 : vector<8x144xf32>
    %33 = vector.extract_strided_slice %2 {offsets = [24, 0], sizes = [8, 1], strides = [1, 1]} : vector<72x1xf32> to vector<8x1xf32>
    %34 = vector.broadcast %33 : vector<8x1xf32> to vector<8x144xf32>
    %35 = arith.addf %32, %34 : vector<8x144xf32>
    %cst_28 = arith.constant 0.000000e+00 : f32
    %36 = vector.broadcast %cst_28 : f32 to vector<8x144xf32>
    %37 = arith.maximumf %35, %36 : vector<8x144xf32>
    %c2 = arith.constant 2 : index
    %c0_29 = arith.constant 0 : index
    %c0_30 = arith.constant 0 : index
    %38 = vector.load %arg5[%c2, %c0_29, %c0_30] : memref<4x8x8xf32, #tpu.memory_space<vmem>>, vector<1x8x8xf32>
    %39 = vector.shape_cast %38 : vector<1x8x8xf32> to vector<8x8xf32>
    %cst_31 = arith.constant dense<0.000000e+00> : vector<8x144xf32>
    %40 = tpu.matmul %39, %22, %cst_31 {dimension_numbers = #tpu.dot_dimension_numbers<[1], [0], [0], [1], [0, 0, 1, 1], [], []>} : vector<8x8xf32>, vector<8x144xf32>, vector<8x144xf32> -> vector<8x144xf32>
    %c3 = arith.constant 3 : index
    %c0_32 = arith.constant 0 : index
    %c0_33 = arith.constant 0 : index
    %41 = vector.load %arg5[%c3, %c0_32, %c0_33] : memref<4x8x8xf32, #tpu.memory_space<vmem>>, vector<1x8x8xf32>
    %42 = vector.shape_cast %41 : vector<1x8x8xf32> to vector<8x8xf32>
    %cst_34 = arith.constant dense<0.000000e+00> : vector<8x144xf32>
    %43 = tpu.matmul %42, %25, %cst_34 {dimension_numbers = #tpu.dot_dimension_numbers<[1], [0], [0], [1], [0, 0, 1, 1], [], []>} : vector<8x8xf32>, vector<8x144xf32>, vector<8x144xf32> -> vector<8x144xf32>
    %44 = arith.addf %40, %43 : vector<8x144xf32>
    %45 = vector.extract_strided_slice %2 {offsets = [32, 0], sizes = [8, 1], strides = [1, 1]} : vector<72x1xf32> to vector<8x1xf32>
    %46 = vector.broadcast %45 : vector<8x1xf32> to vector<8x144xf32>
    %47 = arith.addf %44, %46 : vector<8x144xf32>
    %cst_35 = arith.constant 0.000000e+00 : f32
    %48 = vector.broadcast %cst_35 : f32 to vector<8x144xf32>
    %49 = arith.maximumf %47, %48 : vector<8x144xf32>
    %c0_36 = arith.constant 0 : index
    %c0_37 = arith.constant 0 : index
    %c0_38 = arith.constant 0 : index
    %50 = vector.load %arg6[%c0_36, %c0_37, %c0_38] : memref<2x144x256xf32, #tpu.memory_space<vmem>>, vector<1x144x256xf32>
    %51 = vector.shape_cast %50 : vector<1x144x256xf32> to vector<144x256xf32>
    %cst_39 = arith.constant dense<0.000000e+00> : vector<8x256xf32>
    %52 = tpu.matmul %37, %51, %cst_39 {dimension_numbers = #tpu.dot_dimension_numbers<[1], [0], [0], [1], [0, 0, 1, 1], [], []>} : vector<8x144xf32>, vector<144x256xf32>, vector<8x256xf32> -> vector<8x256xf32>
    %c1_40 = arith.constant 1 : index
    %c0_41 = arith.constant 0 : index
    %c0_42 = arith.constant 0 : index
    %53 = vector.load %arg6[%c1_40, %c0_41, %c0_42] : memref<2x144x256xf32, #tpu.memory_space<vmem>>, vector<1x144x256xf32>
    %54 = vector.shape_cast %53 : vector<1x144x256xf32> to vector<144x256xf32>
    %cst_43 = arith.constant dense<0.000000e+00> : vector<8x256xf32>
    %55 = tpu.matmul %49, %54, %cst_43 {dimension_numbers = #tpu.dot_dimension_numbers<[1], [0], [0], [1], [0, 0, 1, 1], [], []>} : vector<8x144xf32>, vector<144x256xf32>, vector<8x256xf32> -> vector<8x256xf32>
    %56 = arith.addf %52, %55 : vector<8x256xf32>
    %c0_44 = arith.constant 0 : index
    %c0_45 = arith.constant 0 : index
    %c0_46 = arith.constant 0 : index
    %57 = vector.load %arg8[%c0_44, %c0_45, %c0_46] : memref<4x8x8xf32, #tpu.memory_space<vmem>>, vector<1x8x8xf32>
    %58 = vector.shape_cast %57 : vector<1x8x8xf32> to vector<8x8xf32>
    %c0_47 = arith.constant 0 : index
    %c0_48 = arith.constant 0 : index
    %c0_49 = arith.constant 0 : index
    %59 = vector.load %arg7[%c0_47, %c0_48, %c0_49] : memref<4x256x64xf32, #tpu.memory_space<vmem>>, vector<1x256x64xf32>
    %60 = vector.shape_cast %59 : vector<1x256x64xf32> to vector<256x64xf32>
    %cst_50 = arith.constant dense<0.000000e+00> : vector<8x64xf32>
    %61 = tpu.matmul %19, %60, %cst_50 {dimension_numbers = #tpu.dot_dimension_numbers<[1], [0], [0], [1], [0, 0, 1, 1], [], []>} : vector<8x256xf32>, vector<256x64xf32>, vector<8x64xf32> -> vector<8x64xf32>
    %cst_51 = arith.constant dense<0.000000e+00> : vector<8x64xf32>
    %62 = tpu.matmul %58, %61, %cst_51 {dimension_numbers = #tpu.dot_dimension_numbers<[1], [0], [0], [1], [0, 0, 1, 1], [], []>} : vector<8x8xf32>, vector<8x64xf32>, vector<8x64xf32> -> vector<8x64xf32>
    %c1_52 = arith.constant 1 : index
    %c0_53 = arith.constant 0 : index
    %c0_54 = arith.constant 0 : index
    %63 = vector.load %arg8[%c1_52, %c0_53, %c0_54] : memref<4x8x8xf32, #tpu.memory_space<vmem>>, vector<1x8x8xf32>
    %64 = vector.shape_cast %63 : vector<1x8x8xf32> to vector<8x8xf32>
    %c1_55 = arith.constant 1 : index
    %c0_56 = arith.constant 0 : index
    %c0_57 = arith.constant 0 : index
    %65 = vector.load %arg7[%c1_55, %c0_56, %c0_57] : memref<4x256x64xf32, #tpu.memory_space<vmem>>, vector<1x256x64xf32>
    %66 = vector.shape_cast %65 : vector<1x256x64xf32> to vector<256x64xf32>
    %cst_58 = arith.constant dense<0.000000e+00> : vector<8x64xf32>
    %67 = tpu.matmul %19, %66, %cst_58 {dimension_numbers = #tpu.dot_dimension_numbers<[1], [0], [0], [1], [0, 0, 1, 1], [], []>} : vector<8x256xf32>, vector<256x64xf32>, vector<8x64xf32> -> vector<8x64xf32>
    %cst_59 = arith.constant dense<0.000000e+00> : vector<8x64xf32>
    %68 = tpu.matmul %64, %67, %cst_59 {dimension_numbers = #tpu.dot_dimension_numbers<[1], [0], [0], [1], [0, 0, 1, 1], [], []>} : vector<8x8xf32>, vector<8x64xf32>, vector<8x64xf32> -> vector<8x64xf32>
    %69 = arith.addf %62, %68 : vector<8x64xf32>
    %c2_60 = arith.constant 2 : index
    %c0_61 = arith.constant 0 : index
    %c0_62 = arith.constant 0 : index
    %70 = vector.load %arg8[%c2_60, %c0_61, %c0_62] : memref<4x8x8xf32, #tpu.memory_space<vmem>>, vector<1x8x8xf32>
    %71 = vector.shape_cast %70 : vector<1x8x8xf32> to vector<8x8xf32>
    %c2_63 = arith.constant 2 : index
    %c0_64 = arith.constant 0 : index
    %c0_65 = arith.constant 0 : index
    %72 = vector.load %arg7[%c2_63, %c0_64, %c0_65] : memref<4x256x64xf32, #tpu.memory_space<vmem>>, vector<1x256x64xf32>
    %73 = vector.shape_cast %72 : vector<1x256x64xf32> to vector<256x64xf32>
    %cst_66 = arith.constant dense<0.000000e+00> : vector<8x64xf32>
    %74 = tpu.matmul %19, %73, %cst_66 {dimension_numbers = #tpu.dot_dimension_numbers<[1], [0], [0], [1], [0, 0, 1, 1], [], []>} : vector<8x256xf32>, vector<256x64xf32>, vector<8x64xf32> -> vector<8x64xf32>
    %cst_67 = arith.constant dense<0.000000e+00> : vector<8x64xf32>
    %75 = tpu.matmul %71, %74, %cst_67 {dimension_numbers = #tpu.dot_dimension_numbers<[1], [0], [0], [1], [0, 0, 1, 1], [], []>} : vector<8x8xf32>, vector<8x64xf32>, vector<8x64xf32> -> vector<8x64xf32>
    %76 = arith.addf %69, %75 : vector<8x64xf32>
    %c3_68 = arith.constant 3 : index
    %c0_69 = arith.constant 0 : index
    %c0_70 = arith.constant 0 : index
    %77 = vector.load %arg8[%c3_68, %c0_69, %c0_70] : memref<4x8x8xf32, #tpu.memory_space<vmem>>, vector<1x8x8xf32>
    %78 = vector.shape_cast %77 : vector<1x8x8xf32> to vector<8x8xf32>
    %c3_71 = arith.constant 3 : index
    %c0_72 = arith.constant 0 : index
    %c0_73 = arith.constant 0 : index
    %79 = vector.load %arg7[%c3_71, %c0_72, %c0_73] : memref<4x256x64xf32, #tpu.memory_space<vmem>>, vector<1x256x64xf32>
    %80 = vector.shape_cast %79 : vector<1x256x64xf32> to vector<256x64xf32>
    %cst_74 = arith.constant dense<0.000000e+00> : vector<8x64xf32>
    %81 = tpu.matmul %19, %80, %cst_74 {dimension_numbers = #tpu.dot_dimension_numbers<[1], [0], [0], [1], [0, 0, 1, 1], [], []>} : vector<8x256xf32>, vector<256x64xf32>, vector<8x64xf32> -> vector<8x64xf32>
    %cst_75 = arith.constant dense<0.000000e+00> : vector<8x64xf32>
    %82 = tpu.matmul %78, %81, %cst_75 {dimension_numbers = #tpu.dot_dimension_numbers<[1], [0], [0], [1], [0, 0, 1, 1], [], []>} : vector<8x8xf32>, vector<8x64xf32>, vector<8x64xf32> -> vector<8x64xf32>
    %83 = arith.addf %76, %82 : vector<8x64xf32>
    %c0_76 = arith.constant 0 : index
    %c0_77 = arith.constant 0 : index
    %c0_78 = arith.constant 0 : index
    %84 = vector.load %arg9[%c0_76, %c0_77, %c0_78] : memref<2x64x40xf32, #tpu.memory_space<vmem>>, vector<1x64x40xf32>
    %85 = vector.shape_cast %84 : vector<1x64x40xf32> to vector<64x40xf32>
    %cst_79 = arith.constant dense<0.000000e+00> : vector<8x40xf32>
    %86 = tpu.matmul %83, %85, %cst_79 {dimension_numbers = #tpu.dot_dimension_numbers<[1], [0], [0], [1], [0, 0, 1, 1], [], []>} : vector<8x64xf32>, vector<64x40xf32>, vector<8x40xf32> -> vector<8x40xf32>
    %c1_80 = arith.constant 1 : index
    %c0_81 = arith.constant 0 : index
    %c0_82 = arith.constant 0 : index
    %87 = vector.load %arg9[%c1_80, %c0_81, %c0_82] : memref<2x64x40xf32, #tpu.memory_space<vmem>>, vector<1x64x40xf32>
    %88 = vector.shape_cast %87 : vector<1x64x40xf32> to vector<64x40xf32>
    %cst_83 = arith.constant dense<0.000000e+00> : vector<8x40xf32>
    %89 = tpu.matmul %83, %88, %cst_83 {dimension_numbers = #tpu.dot_dimension_numbers<[1], [0], [0], [1], [0, 0, 1, 1], [], []>} : vector<8x64xf32>, vector<64x40xf32>, vector<8x40xf32> -> vector<8x40xf32>
    %c0_84 = arith.constant 0 : index
    %c0_85 = arith.constant 0 : index
    %c0_86 = arith.constant 0 : index
    %90 = vector.load %arg10[%c0_84, %c0_85, %c0_86] : memref<4x8x8xf32, #tpu.memory_space<vmem>>, vector<1x8x8xf32>
    %91 = vector.shape_cast %90 : vector<1x8x8xf32> to vector<8x8xf32>
    %cst_87 = arith.constant dense<0.000000e+00> : vector<8x40xf32>
    %92 = tpu.matmul %91, %86, %cst_87 {dimension_numbers = #tpu.dot_dimension_numbers<[1], [0], [0], [1], [0, 0, 1, 1], [], []>} : vector<8x8xf32>, vector<8x40xf32>, vector<8x40xf32> -> vector<8x40xf32>
    %c1_88 = arith.constant 1 : index
    %c0_89 = arith.constant 0 : index
    %c0_90 = arith.constant 0 : index
    %93 = vector.load %arg10[%c1_88, %c0_89, %c0_90] : memref<4x8x8xf32, #tpu.memory_space<vmem>>, vector<1x8x8xf32>
    %94 = vector.shape_cast %93 : vector<1x8x8xf32> to vector<8x8xf32>
    %cst_91 = arith.constant dense<0.000000e+00> : vector<8x40xf32>
    %95 = tpu.matmul %94, %89, %cst_91 {dimension_numbers = #tpu.dot_dimension_numbers<[1], [0], [0], [1], [0, 0, 1, 1], [], []>} : vector<8x8xf32>, vector<8x40xf32>, vector<8x40xf32> -> vector<8x40xf32>
    %96 = arith.addf %92, %95 : vector<8x40xf32>
    %97 = vector.extract_strided_slice %2 {offsets = [40, 0], sizes = [8, 1], strides = [1, 1]} : vector<72x1xf32> to vector<8x1xf32>
    %98 = vector.broadcast %97 : vector<8x1xf32> to vector<8x40xf32>
    %99 = arith.addf %96, %98 : vector<8x40xf32>
    %cst_92 = arith.constant 0.000000e+00 : f32
    %100 = vector.broadcast %cst_92 : f32 to vector<8x40xf32>
    %101 = arith.maximumf %99, %100 : vector<8x40xf32>
    %c2_93 = arith.constant 2 : index
    %c0_94 = arith.constant 0 : index
    %c0_95 = arith.constant 0 : index
    %102 = vector.load %arg10[%c2_93, %c0_94, %c0_95] : memref<4x8x8xf32, #tpu.memory_space<vmem>>, vector<1x8x8xf32>
    %103 = vector.shape_cast %102 : vector<1x8x8xf32> to vector<8x8xf32>
    %cst_96 = arith.constant dense<0.000000e+00> : vector<8x40xf32>
    %104 = tpu.matmul %103, %86, %cst_96 {dimension_numbers = #tpu.dot_dimension_numbers<[1], [0], [0], [1], [0, 0, 1, 1], [], []>} : vector<8x8xf32>, vector<8x40xf32>, vector<8x40xf32> -> vector<8x40xf32>
    %c3_97 = arith.constant 3 : index
    %c0_98 = arith.constant 0 : index
    %c0_99 = arith.constant 0 : index
    %105 = vector.load %arg10[%c3_97, %c0_98, %c0_99] : memref<4x8x8xf32, #tpu.memory_space<vmem>>, vector<1x8x8xf32>
    %106 = vector.shape_cast %105 : vector<1x8x8xf32> to vector<8x8xf32>
    %cst_100 = arith.constant dense<0.000000e+00> : vector<8x40xf32>
    %107 = tpu.matmul %106, %89, %cst_100 {dimension_numbers = #tpu.dot_dimension_numbers<[1], [0], [0], [1], [0, 0, 1, 1], [], []>} : vector<8x8xf32>, vector<8x40xf32>, vector<8x40xf32> -> vector<8x40xf32>
    %108 = arith.addf %104, %107 : vector<8x40xf32>
    %109 = vector.extract_strided_slice %2 {offsets = [48, 0], sizes = [8, 1], strides = [1, 1]} : vector<72x1xf32> to vector<8x1xf32>
    %110 = vector.broadcast %109 : vector<8x1xf32> to vector<8x40xf32>
    %111 = arith.addf %108, %110 : vector<8x40xf32>
    %cst_101 = arith.constant 0.000000e+00 : f32
    %112 = vector.broadcast %cst_101 : f32 to vector<8x40xf32>
    %113 = arith.maximumf %111, %112 : vector<8x40xf32>
    %c0_102 = arith.constant 0 : index
    %c0_103 = arith.constant 0 : index
    %c0_104 = arith.constant 0 : index
    %114 = vector.load %arg11[%c0_102, %c0_103, %c0_104] : memref<2x40x256xf32, #tpu.memory_space<vmem>>, vector<1x40x256xf32>
    %115 = vector.shape_cast %114 : vector<1x40x256xf32> to vector<40x256xf32>
    %cst_105 = arith.constant dense<0.000000e+00> : vector<8x256xf32>
    %116 = tpu.matmul %101, %115, %cst_105 {dimension_numbers = #tpu.dot_dimension_numbers<[1], [0], [0], [1], [0, 0, 1, 1], [], []>} : vector<8x40xf32>, vector<40x256xf32>, vector<8x256xf32> -> vector<8x256xf32>
    %c1_106 = arith.constant 1 : index
    %c0_107 = arith.constant 0 : index
    %c0_108 = arith.constant 0 : index
    %117 = vector.load %arg11[%c1_106, %c0_107, %c0_108] : memref<2x40x256xf32, #tpu.memory_space<vmem>>, vector<1x40x256xf32>
    %118 = vector.shape_cast %117 : vector<1x40x256xf32> to vector<40x256xf32>
    %cst_109 = arith.constant dense<0.000000e+00> : vector<8x256xf32>
    %119 = tpu.matmul %113, %118, %cst_109 {dimension_numbers = #tpu.dot_dimension_numbers<[1], [0], [0], [1], [0, 0, 1, 1], [], []>} : vector<8x40xf32>, vector<40x256xf32>, vector<8x256xf32> -> vector<8x256xf32>
    %120 = arith.addf %116, %119 : vector<8x256xf32>
    %121 = arith.addf %19, %56 : vector<8x256xf32>
    %122 = arith.addf %121, %120 : vector<8x256xf32>
    %123 = vector.extract_strided_slice %4 {offsets = [16, 0], sizes = [16, 256], strides = [1, 1]} : vector<32x256xf32> to vector<16x256xf32>
    %c0_110 = arith.constant 0 : index
    %c0_111 = arith.constant 0 : index
    %124 = vector.load %arg12[%c0_110, %c0_111] : memref<16x8xf32, #tpu.memory_space<vmem>>, vector<16x8xf32>
    %cst_112 = arith.constant dense<0.000000e+00> : vector<16x256xf32>
    %125 = tpu.matmul %124, %122, %cst_112 {dimension_numbers = #tpu.dot_dimension_numbers<[1], [0], [0], [1], [0, 0, 1, 1], [], []>} : vector<16x8xf32>, vector<8x256xf32>, vector<16x256xf32> -> vector<16x256xf32>
    %126 = arith.addf %123, %125 : vector<16x256xf32>
    %127 = vector.extract_strided_slice %2 {offsets = [56, 0], sizes = [16, 1], strides = [1, 1]} : vector<72x1xf32> to vector<16x1xf32>
    %128 = vector.broadcast %127 : vector<16x1xf32> to vector<16x256xf32>
    %129 = arith.addf %126, %128 : vector<16x256xf32>
    %c0_113 = arith.constant 0 : index
    %c0_114 = arith.constant 0 : index
    %130 = vector.load %arg15[%c0_113, %c0_114] : memref<16x256xf32, #tpu.memory_space<vmem>>, vector<16x256xf32>
    tpu.vector_store %arg15[%c0_113, %c0_114], %129 {strides = array<i32>} : memref<16x256xf32, #tpu.memory_space<vmem>>, vector<16x256xf32>,
    return
  }
}

</mosaic_0001>

<llo_original>
// kernel: ffc_bn_act_forward.1
$region0: #{ffc_bn_act_forward.1}
  #allocation0 [shape = 'u32[]', space=smem, size = 0x4, offset = 0x4, fixed_abs, tag = 'smem constant byte address 0x4 - core index']
  #allocation1 [shape = 'u32[72,128]{1,0:T(1,128)}', space=vmem, size = 0x9000, scoped, tag = 'internal scratch']
  %s0 = inlined_call_operand.vmem [shape: f32[16,256], index: 0, kind: input, shape index: {}]
  %s1 = inlined_call_operand.vmem [shape: f32[16,256], index: 1, kind: input, shape index: {}]
  %s2 = inlined_call_operand.vmem [shape: f32[32,16], index: 2, kind: input, shape index: {}]
  %s3 = inlined_call_operand.vmem [shape: f32[24,16], index: 3, kind: input, shape index: {}]
  %s4 = inlined_call_operand.vmem [shape: f32[2,256,144], index: 4, kind: input, shape index: {}]
  %s5 = inlined_call_operand.vmem [shape: f32[4,8,8], index: 5, kind: input, shape index: {}]
  %s6 = inlined_call_operand.vmem [shape: f32[2,144,256], index: 6, kind: input, shape index: {}]
  %s7 = inlined_call_operand.vmem [shape: f32[4,256,64], index: 7, kind: input, shape index: {}]
  %s8 = inlined_call_operand.vmem [shape: f32[4,8,8], index: 8, kind: input, shape index: {}]
  %s9 = inlined_call_operand.vmem [shape: f32[2,64,40], index: 9, kind: input, shape index: {}]
  %s10 = inlined_call_operand.vmem [shape: f32[4,8,8], index: 10, kind: input, shape index: {}]
  %s11 = inlined_call_operand.vmem [shape: f32[2,40,256], index: 11, kind: input, shape index: {}]
  %s12 = inlined_call_operand.vmem [shape: f32[16,8], index: 12, kind: input, shape index: {}]
  %s13 = inlined_call_operand.vmem [shape: f32[72,1], index: 13, kind: input, shape index: {}]
  %s14 = inlined_call_operand.vmem [shape: f32[16,256], index: 14, kind: output, shape index: {0}]
  %s15 = inlined_call_operand.vmem [shape: f32[16,256], index: 15, kind: output, shape index: {1}]
  %16 = xla_tuple %s14, %s15
  %s17 = sld [smem:[#allocation0]]
  $region74: #{ffc_bn_act_forward.1} parent=0
    _
  %s19 = ssub.s32 1, %s17
  %s20 = scalar_select 0, %s19, %s17
  // Predicated region
  $region2: #{ffc_bn_act_forward.1} parent=0 // pred_check
    _
  $region3: #{ffc_bn_act_forward.1} parent=0 // pred_check_branch
    %22 = sbr.rel (0) target = $region5
  $region4: #{ffc_bn_act_forward.1} parent=0 // pred_region
    _
  $region5: #{ffc_bn_act_forward.1} parent=0 // pred_fallthru
    _
  // Predicated region
  $region6: #{ffc_bn_act_forward.1} parent=0 // pred_check
    _
  $region7: #{ffc_bn_act_forward.1} parent=0 // pred_check_branch
    %24 = sbr.rel (0) target = $region9
  $region8: #{ffc_bn_act_forward.1} parent=0 // pred_region
    _
  $region9: #{ffc_bn_act_forward.1} parent=0 // pred_fallthru
    _
  // Predicated region
  $region10: #{ffc_bn_act_forward.1} parent=0 // pred_check
    _
  $region11: #{ffc_bn_act_forward.1} parent=0 // pred_check_branch
    %26 = sbr.rel (0) target = $region13
  $region12: #{ffc_bn_act_forward.1} parent=0 // pred_region
    _
  $region13: #{ffc_bn_act_forward.1} parent=0 // pred_fallthru
    _
  // Predicated region
  $region14: #{ffc_bn_act_forward.1} parent=0 // pred_check
    _
  $region15: #{ffc_bn_act_forward.1} parent=0 // pred_check_branch
    %28 = sbr.rel (0) target = $region17
  $region16: #{ffc_bn_act_forward.1} parent=0 // pred_region
    _
  $region17: #{ffc_bn_act_forward.1} parent=0 // pred_fallthru
    _
  // Predicated region
  $region18: #{ffc_bn_act_forward.1} parent=0 // pred_check
    _
  $region19: #{ffc_bn_act_forward.1} parent=0 // pred_check_branch
    %30 = sbr.rel (0) target = $region21
  $region20: #{ffc_bn_act_forward.1} parent=0 // pred_region
    _
  $region21: #{ffc_bn_act_forward.1} parent=0 // pred_fallthru
    _
  // Predicated region
  $region22: #{ffc_bn_act_forward.1} parent=0 // pred_check
    _
  $region23: #{ffc_bn_act_forward.1} parent=0 // pred_check_branch
    %32 = sbr.rel (0) target = $region25
  $region24: #{ffc_bn_act_forward.1} parent=0 // pred_region
    _
  $region25: #{ffc_bn_act_forward.1} parent=0 // pred_fallthru
    _
  // Predicated region
  $region26: #{ffc_bn_act_forward.1} parent=0 // pred_check
    _
  $region27: #{ffc_bn_act_forward.1} parent=0 // pred_check_branch
    %34 = sbr.rel (0) target = $region29
  $region28: #{ffc_bn_act_forward.1} parent=0 // pred_region
    _
  $region29: #{ffc_bn_act_forward.1} parent=0 // pred_fallthru
    _
  // Predicated region
  $region30: #{ffc_bn_act_forward.1} parent=0 // pred_check
    _
  $region31: #{ffc_bn_act_forward.1} parent=0 // pred_check_branch
    %36 = sbr.rel (0) target = $region33
  $region32: #{ffc_bn_act_forward.1} parent=0 // pred_region
    _
  $region33: #{ffc_bn_act_forward.1} parent=0 // pred_fallthru
    _
  // Predicated region
  $region34: #{ffc_bn_act_forward.1} parent=0 // pred_check
    _
  $region35: #{ffc_bn_act_forward.1} parent=0 // pred_check_branch
    %38 = sbr.rel (0) target = $region37
  $region36: #{ffc_bn_act_forward.1} parent=0 // pred_region
    _
  $region37: #{ffc_bn_act_forward.1} parent=0 // pred_fallthru
    _
  // Predicated region
  $region38: #{ffc_bn_act_forward.1} parent=0 // pred_check
    _
  $region39: #{ffc_bn_act_forward.1} parent=0 // pred_check_branch
    %40 = sbr.rel (0) target = $region41
  $region40: #{ffc_bn_act_forward.1} parent=0 // pred_region
    _
  $region41: #{ffc_bn_act_forward.1} parent=0 // pred_fallthru
    _
  // Predicated region
  $region42: #{ffc_bn_act_forward.1} parent=0 // pred_check
    _
  $region43: #{ffc_bn_act_forward.1} parent=0 // pred_check_branch
    %42 = sbr.rel (0) target = $region45
  $region44: #{ffc_bn_act_forward.1} parent=0 // pred_region
    _
  $region45: #{ffc_bn_act_forward.1} parent=0 // pred_fallthru
    _
  // Predicated region
  $region46: #{ffc_bn_act_forward.1} parent=0 // pred_check
    _
  $region47: #{ffc_bn_act_forward.1} parent=0 // pred_check_branch
    %44 = sbr.rel (0) target = $region49
  $region48: #{ffc_bn_act_forward.1} parent=0 // pred_region
    _
  $region49: #{ffc_bn_act_forward.1} parent=0 // pred_fallthru
    _
  // Predicated region
  $region50: #{ffc_bn_act_forward.1} parent=0 // pred_check
    _
  $region51: #{ffc_bn_act_forward.1} parent=0 // pred_check_branch
    %46 = sbr.rel (0) target = $region53
  $region52: #{ffc_bn_act_forward.1} parent=0 // pred_region
    _
  $region53: #{ffc_bn_act_forward.1} parent=0 // pred_fallthru
    _
  // Predicated region
  $region54: #{ffc_bn_act_forward.1} parent=0 // pred_check
    _
  $region55: #{ffc_bn_act_forward.1} parent=0 // pred_check_branch
    %48 = sbr.rel (0) target = $region57
  $region56: #{ffc_bn_act_forward.1} parent=0 // pred_region
    _
  $region57: #{ffc_bn_act_forward.1} parent=0 // pred_fallthru
    _
  %v49 = vld [vmem:[%s0] sm:$0xff]
  %v50 = vld [vmem:[%s0 + $0x8] sm:$0xff]
  %v51 = vld [vmem:[%s0 + $0x10] sm:$0xff]
  %v52 = vld [vmem:[%s0 + $0x18] sm:$0xff]
  %v53 = vld [vmem:[%s1] sm:$0xff]
  %v54 = vld [vmem:[%s1 + $0x8] sm:$0xff]
  %v55 = vld [vmem:[%s1 + $0x10] sm:$0xff]
  %v56 = vld [vmem:[%s1 + $0x18] sm:$0xff]
  %v57 = vld [vmem:[%s13] sm:$0xff]
  %v58 = vld [vmem:[%s13 + $0x8] sm:$0xff]
  %v59 = vld [vmem:[%s13 + $0x10] sm:$0xff]
  %v60 = vld [vmem:[%s13 + $0x18] sm:$0xff]
  %v61 = vld [vmem:[%s13 + $0x20] sm:$0xff]
  %v62 = vld [vmem:[%s13 + $0x28] sm:$0xff]
  %v63 = vld [vmem:[%s13 + $0x30] sm:$0xff]
  %v64 = vld [vmem:[%s13 + $0x38] sm:$0xff]
  %v65 = vld [vmem:[%s13 + $0x40] sm:$0xff]
  %v66 = vld [vmem:[%s2] sm:$0xff]
  %v67 = vld [vmem:[%s2 + $0x8] sm:$0xff]
  %v68 = vld [vmem:[%s2 + $0x10] sm:$0xff]
  %v69 = vld [vmem:[%s2 + $0x18] sm:$0xff]
  %vm70 = vcmask 130048
  %v72 = vsel %vm70, %v66, 0
  %v75 = vsel %vm70, %v67, 0
  %v78 = vsel %vm70, %v68, 0
  %v81 = vsel %vm70, %v69, 0
  %83 = vmatpush.msra.mxu0 0.0
  %84 = vmatpush.msra.mxu0 0.0
  %85 = vmatpush.msra.mxu0 0.0
  %86 = vmatpush.msra.mxu0 0.0
  %87 = vmatpush.msra.mxu0 0.0
  %88 = vmatpush.msra.mxu0 0.0
  %89 = vmatpush.msra.mxu0 0.0
  %90 = vmatpush.msra.mxu0 0.0
  %91 = vmatpush.msra.mxu0 0.0
  %92 = vmatpush.msra.mxu0 0.0
  %93 = vmatpush.msra.mxu0 0.0
  %94 = vmatpush.msra.mxu0 0.0
  %95 = vmatpush.msra.mxu0 0.0
  %96 = vmatpush.msra.mxu0 0.0
  %97 = vmatpush.msra.mxu0 %v51
  %98 = vmatpush.msra.mxu0 %v49
  %99 = vmatmul.f32.gmra.mxu0 %v72
  %v100 = vpop.f32.mrf.mxu0
  %v101 = vadd.f32 0.0, %v100
  %102 = vmatmul.f32.gmra.mxu0 %v75
  %v103 = vpop.f32.mrf.mxu0
  %v104 = vadd.f32 0.0, %v103
  %105 = vmatmul.f32.gmra.mxu0 %v78
  %v106 = vpop.f32.mrf.mxu0
  %v107 = vadd.f32 0.0, %v106
  %108 = vmatmul.f32.gmra.mxu0 %v81
  %v109 = vpop.f32.mrf.mxu0
  %v110 = vadd.f32 0.0, %v109
  %111 = vdwg.mxu0
  %112 = vmatpush.msra.mxu0 0.0
  %113 = vmatpush.msra.mxu0 0.0
  %114 = vmatpush.msra.mxu0 0.0
  %115 = vmatpush.msra.mxu0 0.0
  %116 = vmatpush.msra.mxu0 0.0
  %117 = vmatpush.msra.mxu0 0.0
  %118 = vmatpush.msra.mxu0 0.0
  %119 = vmatpush.msra.mxu0 0.0
  %120 = vmatpush.msra.mxu0 0.0
  %121 = vmatpush.msra.mxu0 0.0
  %122 = vmatpush.msra.mxu0 0.0
  %123 = vmatpush.msra.mxu0 0.0
  %124 = vmatpush.msra.mxu0 0.0
  %125 = vmatpush.msra.mxu0 0.0
  %126 = vmatpush.msra.mxu0 %v52
  %127 = vmatpush.msra.mxu0 %v50
  %128 = vmatmul.f32.gmra.mxu0 %v72
  %v129 = vpop.f32.mrf.mxu0
  %v130 = vadd.f32 0.0, %v129
  %131 = vmatmul.f32.gmra.mxu0 %v75
  %v132 = vpop.f32.mrf.mxu0
  %v133 = vadd.f32 0.0, %v132
  %134 = vmatmul.f32.gmra.mxu0 %v78
  %v135 = vpop.f32.mrf.mxu0
  %v136 = vadd.f32 0.0, %v135
  %137 = vmatmul.f32.gmra.mxu0 %v81
  %v138 = vpop.f32.mrf.mxu0
  %v139 = vadd.f32 0.0, %v138
  %140 = vdwg.mxu0
  %v141 = vld [vmem:[%s3] sm:$0xff]
  %v142 = vld [vmem:[%s3 + $0x8] sm:$0xff]
  %v143 = vld [vmem:[%s3 + $0x10] sm:$0xff]
  %v145 = vsel %vm70, %v141, 0
  %v148 = vsel %vm70, %v142, 0
  %v151 = vsel %vm70, %v143, 0
  %153 = vmatpush.msra.mxu0 0.0
  %154 = vmatpush.msra.mxu0 0.0
  %155 = vmatpush.msra.mxu0 0.0
  %156 = vmatpush.msra.mxu0 0.0
  %157 = vmatpush.msra.mxu0 0.0
  %158 = vmatpush.msra.mxu0 0.0
  %159 = vmatpush.msra.mxu0 0.0
  %160 = vmatpush.msra.mxu0 0.0
  %161 = vmatpush.msra.mxu0 0.0
  %162 = vmatpush.msra.mxu0 0.0
  %163 = vmatpush.msra.mxu0 0.0
  %164 = vmatpush.msra.mxu0 0.0
  %165 = vmatpush.msra.mxu0 0.0
  %166 = vmatpush.msra.mxu0 0.0
  %167 = vmatpush.msra.mxu0 %v55
  %168 = vmatpush.msra.mxu0 %v53
  %169 = vmatmul.f32.gmra.mxu0 %v145
  %v170 = vpop.f32.mrf.mxu0
  %v171 = vadd.f32 0.0, %v170
  %172 = vmatmul.f32.gmra.mxu0 %v148
  %v173 = vpop.f32.mrf.mxu0
  %v174 = vadd.f32 0.0, %v173
  %175 = vmatmul.f32.gmra.mxu0 %v151
  %v176 = vpop.f32.mrf.mxu0
  %v177 = vadd.f32 0.0, %v176
  %178 = vdwg.mxu0
  %179 = vmatpush.msra.mxu0 0.0
  %180 = vmatpush.msra.mxu0 0.0
  %181 = vmatpush.msra.mxu0 0.0
  %182 = vmatpush.msra.mxu0 0.0
  %183 = vmatpush.msra.mxu0 0.0
  %184 = vmatpush.msra.mxu0 0.0
  %185 = vmatpush.msra.mxu0 0.0
  %186 = vmatpush.msra.mxu0 0.0
  %187 = vmatpush.msra.mxu0 0.0
  %188 = vmatpush.msra.mxu0 0.0
  %189 = vmatpush.msra.mxu0 0.0
  %190 = vmatpush.msra.mxu0 0.0
  %191 = vmatpush.msra.mxu0 0.0
  %192 = vmatpush.msra.mxu0 0.0
  %193 = vmatpush.msra.mxu0 %v56
  %194 = vmatpush.msra.mxu0 %v54
  %195 = vmatmul.f32.gmra.mxu0 %v145
  %v196 = vpop.f32.mrf.mxu0
  %v197 = vadd.f32 0.0, %v196
  %198 = vmatmul.f32.gmra.mxu0 %v148
  %v199 = vpop.f32.mrf.mxu0
  %v200 = vadd.f32 0.0, %v199
  %201 = vmatmul.f32.gmra.mxu0 %v151
  %v202 = vpop.f32.mrf.mxu0
  %v203 = vadd.f32 0.0, %v202
  %204 = vdwg.mxu0
  %v205 = vadd.f32 %v101, %v171
  %v206 = vadd.f32 %v130, %v197
  %v207 = vadd.f32 %v104, %v174
  %v208 = vadd.f32 %v133, %v200
  %210 = vset.pattern.permute.xlu0 0
  %211 = vperm.xlu0 %210, %v57
  %v212 = vpop.permute.xlu0 %211
  %215 = vset.pattern.permute.xlu0 0
  %216 = vperm.xlu0 %215, %v58
  %v217 = vpop.permute.xlu0 %216
  %v219 = vadd.f32 %v205, %v212
  %v220 = vadd.f32 %v206, %v212
  %v221 = vadd.f32 %v207, %v217
  %v222 = vadd.f32 %v208, %v217
  %223 = vst [vmem:[%s14] sm:$0xff] %v219
  %224 = vst [vmem:[%s14 + $0x8] sm:$0xff] %v220
  %225 = vst [vmem:[%s14 + $0x10] sm:$0xff] %v221
  %226 = vst [vmem:[%s14 + $0x18] sm:$0xff] %v222
  %228 = vset.pattern.permute.xlu0 0
  %229 = vperm.xlu0 %228, %v59
  %v230 = vpop.permute.xlu0 %229
  %v232 = vadd.f32 %v177, %v230
  %v233 = vadd.f32 %v203, %v230
  %v234 = vmax.f32 %v232, 0.0
  %v235 = vmax.f32 %v233, 0.0
  %v236 = vld [vmem:[%s4] sm:$0xff]
  %v237 = vld [vmem:[%s4 + $0x8] sm:$0xff]
  %v238 = vld [vmem:[%s4 + $0x10] sm:$0xff]
  %v239 = vld [vmem:[%s4 + $0x18] sm:$0xff]
  %v240 = vld [vmem:[%s4 + $0x20] sm:$0xff]
  %v241 = vld [vmem:[%s4 + $0x28] sm:$0xff]
  %v242 = vld [vmem:[%s4 + $0x30] sm:$0xff]
  %v243 = vld [vmem:[%s4 + $0x38] sm:$0xff]
  %v244 = vld [vmem:[%s4 + $0x40] sm:$0xff]
  %v245 = vld [vmem:[%s4 + $0x48] sm:$0xff]
  %v246 = vld [vmem:[%s4 + $0x50] sm:$0xff]
  %v247 = vld [vmem:[%s4 + $0x58] sm:$0xff]
  %v248 = vld [vmem:[%s4 + $0x60] sm:$0xff]
  %v249 = vld [vmem:[%s4 + $0x68] sm:$0xff]
  %v250 = vld [vmem:[%s4 + $0x70] sm:$0xff]
  %v251 = vld [vmem:[%s4 + $0x78] sm:$0xff]
  %v252 = vld [vmem:[%s4 + $0x80] sm:$0xff]
  %v253 = vld [vmem:[%s4 + $0x88] sm:$0xff]
  %v254 = vld [vmem:[%s4 + $0x90] sm:$0xff]
  %v255 = vld [vmem:[%s4 + $0x98] sm:$0xff]
  %v256 = vld [vmem:[%s4 + $0xa0] sm:$0xff]
  %v257 = vld [vmem:[%s4 + $0xa8] sm:$0xff]
  %v258 = vld [vmem:[%s4 + $0xb0] sm:$0xff]
  %v259 = vld [vmem:[%s4 + $0xb8] sm:$0xff]
  %v260 = vld [vmem:[%s4 + $0xc0] sm:$0xff]
  %v261 = vld [vmem:[%s4 + $0xc8] sm:$0xff]
  %v262 = vld [vmem:[%s4 + $0xd0] sm:$0xff]
  %v263 = vld [vmem:[%s4 + $0xd8] sm:$0xff]
  %v264 = vld [vmem:[%s4 + $0xe0] sm:$0xff]
  %v265 = vld [vmem:[%s4 + $0xe8] sm:$0xff]
  %v266 = vld [vmem:[%s4 + $0xf0] sm:$0xff]
  %v267 = vld [vmem:[%s4 + $0xf8] sm:$0xff]
  %v268 = vld [vmem:[%s4 + $0x100] sm:$0xff]
  %v269 = vld [vmem:[%s4 + $0x108] sm:$0xff]
  %v270 = vld [vmem:[%s4 + $0x110] sm:$0xff]
  %v271 = vld [vmem:[%s4 + $0x118] sm:$0xff]
  %v272 = vld [vmem:[%s4 + $0x120] sm:$0xff]
  %v273 = vld [vmem:[%s4 + $0x128] sm:$0xff]
  %v274 = vld [vmem:[%s4 + $0x130] sm:$0xff]
  %v275 = vld [vmem:[%s4 + $0x138] sm:$0xff]
  %v276 = vld [vmem:[%s4 + $0x140] sm:$0xff]
  %v277 = vld [vmem:[%s4 + $0x148] sm:$0xff]
  %v278 = vld [vmem:[%s4 + $0x150] sm:$0xff]
  %v279 = vld [vmem:[%s4 + $0x158] sm:$0xff]
  %v280 = vld [vmem:[%s4 + $0x160] sm:$0xff]
  %v281 = vld [vmem:[%s4 + $0x168] sm:$0xff]
  %v282 = vld [vmem:[%s4 + $0x170] sm:$0xff]
  %v283 = vld [vmem:[%s4 + $0x178] sm:$0xff]
  %v284 = vld [vmem:[%s4 + $0x180] sm:$0xff]
  %v285 = vld [vmem:[%s4 + $0x188] sm:$0xff]
  %v286 = vld [vmem:[%s4 + $0x190] sm:$0xff]
  %v287 = vld [vmem:[%s4 + $0x198] sm:$0xff]
  %v288 = vld [vmem:[%s4 + $0x1a0] sm:$0xff]
  %v289 = vld [vmem:[%s4 + $0x1a8] sm:$0xff]
  %v290 = vld [vmem:[%s4 + $0x1b0] sm:$0xff]
  %v291 = vld [vmem:[%s4 + $0x1b8] sm:$0xff]
  %v292 = vld [vmem:[%s4 + $0x1c0] sm:$0xff]
  %v293 = vld [vmem:[%s4 + $0x1c8] sm:$0xff]
  %v294 = vld [vmem:[%s4 + $0x1d0] sm:$0xff]
  %v295 = vld [vmem:[%s4 + $0x1d8] sm:$0xff]
  %v296 = vld [vmem:[%s4 + $0x1e0] sm:$0xff]
  %v297 = vld [vmem:[%s4 + $0x1e8] sm:$0xff]
  %v298 = vld [vmem:[%s4 + $0x1f0] sm:$0xff]
  %v299 = vld [vmem:[%s4 + $0x1f8] sm:$0xff]
  %300 = vmatpush.msra.mxu0 %v266
  %301 = vmatpush.msra.mxu0 %v264
  %302 = vmatpush.msra.mxu0 %v262
  %303 = vmatpush.msra.mxu0 %v260
  %304 = vmatpush.msra.mxu0 %v258
  %305 = vmatpush.msra.mxu0 %v256
  %306 = vmatpush.msra.mxu0 %v254
  %307 = vmatpush.msra.mxu0 %v252
  %308 = vmatpush.msra.mxu0 %v250
  %309 = vmatpush.msra.mxu0 %v248
  %310 = vmatpush.msra.mxu0 %v246
  %311 = vmatpush.msra.mxu0 %v244
  %312 = vmatpush.msra.mxu0 %v242
  %313 = vmatpush.msra.mxu0 %v240
  %314 = vmatpush.msra.mxu0 %v238
  %315 = vmatpush.msra.mxu0 %v236
  %316 = vmatmul.f32.gmra.mxu0 %v234
  %v317 = vpop.f32.mrf.mxu0
  %v318 = vadd.f32 0.0, %v317
  %319 = vdwg.mxu0
  %320 = vmatpush.msra.mxu0 %v298
  %321 = vmatpush.msra.mxu0 %v296
  %322 = vmatpush.msra.mxu0 %v294
  %323 = vmatpush.msra.mxu0 %v292
  %324 = vmatpush.msra.mxu0 %v290
  %325 = vmatpush.msra.mxu0 %v288
  %326 = vmatpush.msra.mxu0 %v286
  %327 = vmatpush.msra.mxu0 %v284
  %328 = vmatpush.msra.mxu0 %v282
  %329 = vmatpush.msra.mxu0 %v280
  %330 = vmatpush.msra.mxu0 %v278
  %331 = vmatpush.msra.mxu0 %v276
  %332 = vmatpush.msra.mxu0 %v274
  %333 = vmatpush.msra.mxu0 %v272
  %334 = vmatpush.msra.mxu0 %v270
  %335 = vmatpush.msra.mxu0 %v268
  %336 = vmatmul.f32.gmra.mxu0 %v235
  %v337 = vpop.f32.mrf.mxu0
  %v338 = vadd.f32 %v318, %v337
  %339 = vdwg.mxu0
  %340 = vmatpush.msra.mxu0 %v267
  %341 = vmatpush.msra.mxu0 %v265
  %342 = vmatpush.msra.mxu0 %v263
  %343 = vmatpush.msra.mxu0 %v261
  %344 = vmatpush.msra.mxu0 %v259
  %345 = vmatpush.msra.mxu0 %v257
  %346 = vmatpush.msra.mxu0 %v255
  %347 = vmatpush.msra.mxu0 %v253
  %348 = vmatpush.msra.mxu0 %v251
  %349 = vmatpush.msra.mxu0 %v249
  %350 = vmatpush.msra.mxu0 %v247
  %351 = vmatpush.msra.mxu0 %v245
  %352 = vmatpush.msra.mxu0 %v243
  %353 = vmatpush.msra.mxu0 %v241
  %354 = vmatpush.msra.mxu0 %v239
  %355 = vmatpush.msra.mxu0 %v237
  %356 = vmatmul.f32.gmra.mxu0 %v234
  %v357 = vpop.f32.mrf.mxu0
  %v358 = vadd.f32 0.0, %v357
  %359 = vdwg.mxu0
  %360 = vmatpush.msra.mxu0 %v299
  %361 = vmatpush.msra.mxu0 %v297
  %362 = vmatpush.msra.mxu0 %v295
  %363 = vmatpush.msra.mxu0 %v293
  %364 = vmatpush.msra.mxu0 %v291
  %365 = vmatpush.msra.mxu0 %v289
  %366 = vmatpush.msra.mxu0 %v287
  %367 = vmatpush.msra.mxu0 %v285
  %368 = vmatpush.msra.mxu0 %v283
  %369 = vmatpush.msra.mxu0 %v281
  %370 = vmatpush.msra.mxu0 %v279
  %371 = vmatpush.msra.mxu0 %v277
  %372 = vmatpush.msra.mxu0 %v275
  %373 = vmatpush.msra.mxu0 %v273
  %374 = vmatpush.msra.mxu0 %v271
  %375 = vmatpush.msra.mxu0 %v269
  %376 = vmatmul.f32.gmra.mxu0 %v235
  %v377 = vpop.f32.mrf.mxu0
  %v378 = vadd.f32 %v358, %v377
  %379 = vdwg.mxu0
  %s380 = scalar_lea.vmem %s4, 512
  %v381 = vld [vmem:[%s380] sm:$0xff]
  %v382 = vld [vmem:[%s380 + $0x8] sm:$0xff]
  %v383 = vld [vmem:[%s380 + $0x10] sm:$0xff]
  %v384 = vld [vmem:[%s380 + $0x18] sm:$0xff]
  %v385 = vld [vmem:[%s380 + $0x20] sm:$0xff]
  %v386 = vld [vmem:[%s380 + $0x28] sm:$0xff]
  %v387 = vld [vmem:[%s380 + $0x30] sm:$0xff]
  %v388 = vld [vmem:[%s380 + $0x38] sm:$0xff]
  %v389 = vld [vmem:[%s380 + $0x40] sm:$0xff]
  %v390 = vld [vmem:[%s380 + $0x48] sm:$0xff]
  %v391 = vld [vmem:[%s380 + $0x50] sm:$0xff]
  %v392 = vld [vmem:[%s380 + $0x58] sm:$0xff]
  %v393 = vld [vmem:[%s380 + $0x60] sm:$0xff]
  %v394 = vld [vmem:[%s380 + $0x68] sm:$0xff]
  %v395 = vld [vmem:[%s380 + $0x70] sm:$0xff]
  %v396 = vld [vmem:[%s380 + $0x78] sm:$0xff]
  %v397 = vld [vmem:[%s380 + $0x80] sm:$0xff]
  %v398 = vld [vmem:[%s380 + $0x88] sm:$0xff]
  %v399 = vld [vmem:[%s380 + $0x90] sm:$0xff]
  %v400 = vld [vmem:[%s380 + $0x98] sm:$0xff]
  %v401 = vld [vmem:[%s380 + $0xa0] sm:$0xff]
  %v402 = vld [vmem:[%s380 + $0xa8] sm:$0xff]
  %v403 = vld [vmem:[%s380 + $0xb0] sm:$0xff]
  %v404 = vld [vmem:[%s380 + $0xb8] sm:$0xff]
  %v405 = vld [vmem:[%s380 + $0xc0] sm:$0xff]
  %v406 = vld [vmem:[%s380 + $0xc8] sm:$0xff]
  %v407 = vld [vmem:[%s380 + $0xd0] sm:$0xff]
  %v408 = vld [vmem:[%s380 + $0xd8] sm:$0xff]
  %v409 = vld [vmem:[%s380 + $0xe0] sm:$0xff]
  %v410 = vld [vmem:[%s380 + $0xe8] sm:$0xff]
  %v411 = vld [vmem:[%s380 + $0xf0] sm:$0xff]
  %v412 = vld [vmem:[%s380 + $0xf8] sm:$0xff]
  %v413 = vld [vmem:[%s380 + $0x100] sm:$0xff]
  %v414 = vld [vmem:[%s380 + $0x108] sm:$0xff]
  %v415 = vld [vmem:[%s380 + $0x110] sm:$0xff]
  %v416 = vld [vmem:[%s380 + $0x118] sm:$0xff]
  %v417 = vld [vmem:[%s380 + $0x120] sm:$0xff]
  %v418 = vld [vmem:[%s380 + $0x128] sm:$0xff]
  %v419 = vld [vmem:[%s380 + $0x130] sm:$0xff]
  %v420 = vld [vmem:[%s380 + $0x138] sm:$0xff]
  %v421 = vld [vmem:[%s380 + $0x140] sm:$0xff]
  %v422 = vld [vmem:[%s380 + $0x148] sm:$0xff]
  %v423 = vld [vmem:[%s380 + $0x150] sm:$0xff]
  %v424 = vld [vmem:[%s380 + $0x158] sm:$0xff]
  %v425 = vld [vmem:[%s380 + $0x160] sm:$0xff]
  %v426 = vld [vmem:[%s380 + $0x168] sm:$0xff]
  %v427 = vld [vmem:[%s380 + $0x170] sm:$0xff]
  %v428 = vld [vmem:[%s380 + $0x178] sm:$0xff]
  %v429 = vld [vmem:[%s380 + $0x180] sm:$0xff]
  %v430 = vld [vmem:[%s380 + $0x188] sm:$0xff]
  %v431 = vld [vmem:[%s380 + $0x190] sm:$0xff]
  %v432 = vld [vmem:[%s380 + $0x198] sm:$0xff]
  %v433 = vld [vmem:[%s380 + $0x1a0] sm:$0xff]
  %v434 = vld [vmem:[%s380 + $0x1a8] sm:$0xff]
  %v435 = vld [vmem:[%s380 + $0x1b0] sm:$0xff]
  %v436 = vld [vmem:[%s380 + $0x1b8] sm:$0xff]
  %v437 = vld [vmem:[%s380 + $0x1c0] sm:$0xff]
  %v438 = vld [vmem:[%s380 + $0x1c8] sm:$0xff]
  %v439 = vld [vmem:[%s380 + $0x1d0] sm:$0xff]
  %v440 = vld [vmem:[%s380 + $0x1d8] sm:$0xff]
  %v441 = vld [vmem:[%s380 + $0x1e0] sm:$0xff]
  %v442 = vld [vmem:[%s380 + $0x1e8] sm:$0xff]
  %v443 = vld [vmem:[%s380 + $0x1f0] sm:$0xff]
  %v444 = vld [vmem:[%s380 + $0x1f8] sm:$0xff]
  %445 = vmatpush.msra.mxu0 %v411
  %446 = vmatpush.msra.mxu0 %v409
  %447 = vmatpush.msra.mxu0 %v407
  %448 = vmatpush.msra.mxu0 %v405
  %449 = vmatpush.msra.mxu0 %v403
  %450 = vmatpush.msra.mxu0 %v401
  %451 = vmatpush.msra.mxu0 %v399
  %452 = vmatpush.msra.mxu0 %v397
  %453 = vmatpush.msra.mxu0 %v395
  %454 = vmatpush.msra.mxu0 %v393
  %455 = vmatpush.msra.mxu0 %v391
  %456 = vmatpush.msra.mxu0 %v389
  %457 = vmatpush.msra.mxu0 %v387
  %458 = vmatpush.msra.mxu0 %v385
  %459 = vmatpush.msra.mxu0 %v383
  %460 = vmatpush.msra.mxu0 %v381
  %461 = vmatmul.f32.gmra.mxu0 %v234
  %v462 = vpop.f32.mrf.mxu0
  %v463 = vadd.f32 0.0, %v462
  %464 = vdwg.mxu0
  %465 = vmatpush.msra.mxu0 %v443
  %466 = vmatpush.msra.mxu0 %v441
  %467 = vmatpush.msra.mxu0 %v439
  %468 = vmatpush.msra.mxu0 %v437
  %469 = vmatpush.msra.mxu0 %v435
  %470 = vmatpush.msra.mxu0 %v433
  %471 = vmatpush.msra.mxu0 %v431
  %472 = vmatpush.msra.mxu0 %v429
  %473 = vmatpush.msra.mxu0 %v427
  %474 = vmatpush.msra.mxu0 %v425
  %475 = vmatpush.msra.mxu0 %v423
  %476 = vmatpush.msra.mxu0 %v421
  %477 = vmatpush.msra.mxu0 %v419
  %478 = vmatpush.msra.mxu0 %v417
  %479 = vmatpush.msra.mxu0 %v415
  %480 = vmatpush.msra.mxu0 %v413
  %481 = vmatmul.f32.gmra.mxu0 %v235
  %v482 = vpop.f32.mrf.mxu0
  %v483 = vadd.f32 %v463, %v482
  %484 = vdwg.mxu0
  %485 = vmatpush.msra.mxu0 %v412
  %486 = vmatpush.msra.mxu0 %v410
  %487 = vmatpush.msra.mxu0 %v408
  %488 = vmatpush.msra.mxu0 %v406
  %489 = vmatpush.msra.mxu0 %v404
  %490 = vmatpush.msra.mxu0 %v402
  %491 = vmatpush.msra.mxu0 %v400
  %492 = vmatpush.msra.mxu0 %v398
  %493 = vmatpush.msra.mxu0 %v396
  %494 = vmatpush.msra.mxu0 %v394
  %495 = vmatpush.msra.mxu0 %v392
  %496 = vmatpush.msra.mxu0 %v390
  %497 = vmatpush.msra.mxu0 %v388
  %498 = vmatpush.msra.mxu0 %v386
  %499 = vmatpush.msra.mxu0 %v384
  %500 = vmatpush.msra.mxu0 %v382
  %501 = vmatmul.f32.gmra.mxu0 %v234
  %v502 = vpop.f32.mrf.mxu0
  %v503 = vadd.f32 0.0, %v502
  %504 = vdwg.mxu0
  %505 = vmatpush.msra.mxu0 %v444
  %506 = vmatpush.msra.mxu0 %v442
  %507 = vmatpush.msra.mxu0 %v440
  %508 = vmatpush.msra.mxu0 %v438
  %509 = vmatpush.msra.mxu0 %v436
  %510 = vmatpush.msra.mxu0 %v434
  %511 = vmatpush.msra.mxu0 %v432
  %512 = vmatpush.msra.mxu0 %v430
  %513 = vmatpush.msra.mxu0 %v428
  %514 = vmatpush.msra.mxu0 %v426
  %515 = vmatpush.msra.mxu0 %v424
  %516 = vmatpush.msra.mxu0 %v422
  %517 = vmatpush.msra.mxu0 %v420
  %518 = vmatpush.msra.mxu0 %v418
  %519 = vmatpush.msra.mxu0 %v416
  %520 = vmatpush.msra.mxu0 %v414
  %521 = vmatmul.f32.gmra.mxu0 %v235
  %v522 = vpop.f32.mrf.mxu0
  %v523 = vadd.f32 %v503, %v522
  %524 = vdwg.mxu0
  %v525 = vld [vmem:[%s5] sm:$0xff]
  %s526 = scalar_lea.vmem %s5, 8
  %v527 = vld [vmem:[%s526] sm:$0xff]
  %vm528 = vcmask 64512
  %v530 = vsel %vm528, %v527, 0
  %532 = vmatpush.msra.mxu0 0.0
  %533 = vmatpush.msra.mxu0 0.0
  %534 = vmatpush.msra.mxu0 0.0
  %535 = vmatpush.msra.mxu0 0.0
  %536 = vmatpush.msra.mxu0 0.0
  %537 = vmatpush.msra.mxu0 0.0
  %538 = vmatpush.msra.mxu0 0.0
  %539 = vmatpush.msra.mxu0 0.0
  %540 = vmatpush.msra.mxu0 0.0
  %541 = vmatpush.msra.mxu0 0.0
  %542 = vmatpush.msra.mxu0 0.0
  %543 = vmatpush.msra.mxu0 0.0
  %544 = vmatpush.msra.mxu0 0.0
  %545 = vmatpush.msra.mxu0 0.0
  %546 = vmatpush.msra.mxu0 0.0
  %547 = vmatpush.msra.mxu0 %v483
  %548 = vmatmul.f32.gmra.mxu0 %v530
  %v549 = vpop.f32.mrf.mxu0
  %v550 = vadd.f32 0.0, %v549
  %551 = vdwg.mxu0
  %552 = vmatpush.msra.mxu0 0.0
  %553 = vmatpush.msra.mxu0 0.0
  %554 = vmatpush.msra.mxu0 0.0
  %555 = vmatpush.msra.mxu0 0.0
  %556 = vmatpush.msra.mxu0 0.0
  %557 = vmatpush.msra.mxu0 0.0
  %558 = vmatpush.msra.mxu0 0.0
  %559 = vmatpush.msra.mxu0 0.0
  %560 = vmatpush.msra.mxu0 0.0
  %561 = vmatpush.msra.mxu0 0.0
  %562 = vmatpush.msra.mxu0 0.0
  %563 = vmatpush.msra.mxu0 0.0
  %564 = vmatpush.msra.mxu0 0.0
  %565 = vmatpush.msra.mxu0 0.0
  %566 = vmatpush.msra.mxu0 0.0
  %567 = vmatpush.msra.mxu0 %v523
  %568 = vmatmul.f32.gmra.mxu0 %v530
  %v569 = vpop.f32.mrf.mxu0
  %v570 = vadd.f32 0.0, %v569
  %571 = vdwg.mxu0
  %v573 = vsel %vm528, %v525, 0
  %575 = vmatpush.msra.mxu0 0.0
  %576 = vmatpush.msra.mxu0 0.0
  %577 = vmatpush.msra.mxu0 0.0
  %578 = vmatpush.msra.mxu0 0.0
  %579 = vmatpush.msra.mxu0 0.0
  %580 = vmatpush.msra.mxu0 0.0
  %581 = vmatpush.msra.mxu0 0.0
  %582 = vmatpush.msra.mxu0 0.0
  %583 = vmatpush.msra.mxu0 0.0
  %584 = vmatpush.msra.mxu0 0.0
  %585 = vmatpush.msra.mxu0 0.0
  %586 = vmatpush.msra.mxu0 0.0
  %587 = vmatpush.msra.mxu0 0.0
  %588 = vmatpush.msra.mxu0 0.0
  %589 = vmatpush.msra.mxu0 0.0
  %590 = vmatpush.msra.mxu0 %v338
  %591 = vmatmul.f32.gmra.mxu0 %v573
  %v592 = vpop.f32.mrf.mxu0
  %v593 = vadd.f32 %v550, %v592
  %594 = vdwg.mxu0
  %595 = vmatpush.msra.mxu0 0.0
  %596 = vmatpush.msra.mxu0 0.0
  %597 = vmatpush.msra.mxu0 0.0
  %598 = vmatpush.msra.mxu0 0.0
  %599 = vmatpush.msra.mxu0 0.0
  %600 = vmatpush.msra.mxu0 0.0
  %601 = vmatpush.msra.mxu0 0.0
  %602 = vmatpush.msra.mxu0 0.0
  %603 = vmatpush.msra.mxu0 0.0
  %604 = vmatpush.msra.mxu0 0.0
  %605 = vmatpush.msra.mxu0 0.0
  %606 = vmatpush.msra.mxu0 0.0
  %607 = vmatpush.msra.mxu0 0.0
  %608 = vmatpush.msra.mxu0 0.0
  %609 = vmatpush.msra.mxu0 0.0
  %610 = vmatpush.msra.mxu0 %v378
  %611 = vmatmul.f32.gmra.mxu0 %v573
  %v612 = vpop.f32.mrf.mxu0
  %v613 = vadd.f32 %v570, %v612
  %614 = vdwg.mxu0
  %616 = vset.pattern.permute.xlu0 0
  %617 = vperm.xlu0 %616, %v60
  %v618 = vpop.permute.xlu0 %617
  %v620 = vadd.f32 %v593, %v618
  %v621 = vadd.f32 %v613, %v618
  %v622 = vmax.f32 %v620, 0.0
  %v623 = vmax.f32 %v621, 0.0
  %s624 = scalar_lea.vmem %s5, 16
  %v625 = vld [vmem:[%s624] sm:$0xff]
  %s626 = scalar_lea.vmem %s5, 24
  %v627 = vld [vmem:[%s626] sm:$0xff]
  %v629 = vsel %vm528, %v627, 0
  %631 = vmatpush.msra.mxu0 0.0
  %632 = vmatpush.msra.mxu0 0.0
  %633 = vmatpush.msra.mxu0 0.0
  %634 = vmatpush.msra.mxu0 0.0
  %635 = vmatpush.msra.mxu0 0.0
  %636 = vmatpush.msra.mxu0 0.0
  %637 = vmatpush.msra.mxu0 0.0
  %638 = vmatpush.msra.mxu0 0.0
  %639 = vmatpush.msra.mxu0 0.0
  %640 = vmatpush.msra.mxu0 0.0
  %641 = vmatpush.msra.mxu0 0.0
  %642 = vmatpush.msra.mxu0 0.0
  %643 = vmatpush.msra.mxu0 0.0
  %644 = vmatpush.msra.mxu0 0.0
  %645 = vmatpush.msra.mxu0 0.0
  %646 = vmatpush.msra.mxu0 %v483
  %647 = vmatmul.f32.gmra.mxu0 %v629
  %v648 = vpop.f32.mrf.mxu0
  %v649 = vadd.f32 0.0, %v648
  %650 = vdwg.mxu0
  %651 = vmatpush.msra.mxu0 0.0
  %652 = vmatpush.msra.mxu0 0.0
  %653 = vmatpush.msra.mxu0 0.0
  %654 = vmatpush.msra.mxu0 0.0
  %655 = vmatpush.msra.mxu0 0.0
  %656 = vmatpush.msra.mxu0 0.0
  %657 = vmatpush.msra.mxu0 0.0
  %658 = vmatpush.msra.mxu0 0.0
  %659 = vmatpush.msra.mxu0 0.0
  %660 = vmatpush.msra.mxu0 0.0
  %661 = vmatpush.msra.mxu0 0.0
  %662 = vmatpush.msra.mxu0 0.0
  %663 = vmatpush.msra.mxu0 0.0
  %664 = vmatpush.msra.mxu0 0.0
  %665 = vmatpush.msra.mxu0 0.0
  %666 = vmatpush.msra.mxu0 %v523
  %667 = vmatmul.f32.gmra.mxu0 %v629
  %v668 = vpop.f32.mrf.mxu0
  %v669 = vadd.f32 0.0, %v668
  %670 = vdwg.mxu0
  %v672 = vsel %vm528, %v625, 0
  %674 = vmatpush.msra.mxu0 0.0
  %675 = vmatpush.msra.mxu0 0.0
  %676 = vmatpush.msra.mxu0 0.0
  %677 = vmatpush.msra.mxu0 0.0
  %678 = vmatpush.msra.mxu0 0.0
  %679 = vmatpush.msra.mxu0 0.0
  %680 = vmatpush.msra.mxu0 0.0
  %681 = vmatpush.msra.mxu0 0.0
  %682 = vmatpush.msra.mxu0 0.0
  %683 = vmatpush.msra.mxu0 0.0
  %684 = vmatpush.msra.mxu0 0.0
  %685 = vmatpush.msra.mxu0 0.0
  %686 = vmatpush.msra.mxu0 0.0
  %687 = vmatpush.msra.mxu0 0.0
  %688 = vmatpush.msra.mxu0 0.0
  %689 = vmatpush.msra.mxu0 %v338
  %690 = vmatmul.f32.gmra.mxu0 %v672
  %v691 = vpop.f32.mrf.mxu0
  %v692 = vadd.f32 %v649, %v691
  %693 = vdwg.mxu0
  %694 = vmatpush.msra.mxu0 0.0
  %695 = vmatpush.msra.mxu0 0.0
  %696 = vmatpush.msra.mxu0 0.0
  %697 = vmatpush.msra.mxu0 0.0
  %698 = vmatpush.msra.mxu0 0.0
  %699 = vmatpush.msra.mxu0 0.0
  %700 = vmatpush.msra.mxu0 0.0
  %701 = vmatpush.msra.mxu0 0.0
  %702 = vmatpush.msra.mxu0 0.0
  %703 = vmatpush.msra.mxu0 0.0
  %704 = vmatpush.msra.mxu0 0.0
  %705 = vmatpush.msra.mxu0 0.0
  %706 = vmatpush.msra.mxu0 0.0
  %707 = vmatpush.msra.mxu0 0.0
  %708 = vmatpush.msra.mxu0 0.0
  %709 = vmatpush.msra.mxu0 %v378
  %710 = vmatmul.f32.gmra.mxu0 %v672
  %v711 = vpop.f32.mrf.mxu0
  %v712 = vadd.f32 %v669, %v711
  %713 = vdwg.mxu0
  %715 = vset.pattern.permute.xlu0 0
  %716 = vperm.xlu0 %715, %v61
  %v717 = vpop.permute.xlu0 %716
  %v719 = vadd.f32 %v692, %v717
  %v720 = vadd.f32 %v712, %v717
  %v721 = vmax.f32 %v719, 0.0
  %v722 = vmax.f32 %v720, 0.0
  %v723 = vld [vmem:[%s6] sm:$0xff]
  %v724 = vld [vmem:[%s6 + $0x8] sm:$0xff]
  %v725 = vld [vmem:[%s6 + $0x10] sm:$0xff]
  %v726 = vld [vmem:[%s6 + $0x18] sm:$0xff]
  %v727 = vld [vmem:[%s6 + $0x20] sm:$0xff]
  %v728 = vld [vmem:[%s6 + $0x28] sm:$0xff]
  %v729 = vld [vmem:[%s6 + $0x30] sm:$0xff]
  %v730 = vld [vmem:[%s6 + $0x38] sm:$0xff]
  %v731 = vld [vmem:[%s6 + $0x40] sm:$0xff]
  %v732 = vld [vmem:[%s6 + $0x48] sm:$0xff]
  %v733 = vld [vmem:[%s6 + $0x50] sm:$0xff]
  %v734 = vld [vmem:[%s6 + $0x58] sm:$0xff]
  %v735 = vld [vmem:[%s6 + $0x60] sm:$0xff]
  %v736 = vld [vmem:[%s6 + $0x68] sm:$0xff]
  %v737 = vld [vmem:[%s6 + $0x70] sm:$0xff]
  %v738 = vld [vmem:[%s6 + $0x78] sm:$0xff]
  %v739 = vld [vmem:[%s6 + $0x80] sm:$0xff]
  %v740 = vld [vmem:[%s6 + $0x88] sm:$0xff]
  %v741 = vld [vmem:[%s6 + $0x90] sm:$0xff]
  %v742 = vld [vmem:[%s6 + $0x98] sm:$0xff]
  %v743 = vld [vmem:[%s6 + $0xa0] sm:$0xff]
  %v744 = vld [vmem:[%s6 + $0xa8] sm:$0xff]
  %v745 = vld [vmem:[%s6 + $0xb0] sm:$0xff]
  %v746 = vld [vmem:[%s6 + $0xb8] sm:$0xff]
  %v747 = vld [vmem:[%s6 + $0xc0] sm:$0xff]
  %v748 = vld [vmem:[%s6 + $0xc8] sm:$0xff]
  %v749 = vld [vmem:[%s6 + $0xd0] sm:$0xff]
  %v750 = vld [vmem:[%s6 + $0xd8] sm:$0xff]
  %v751 = vld [vmem:[%s6 + $0xe0] sm:$0xff]
  %v752 = vld [vmem:[%s6 + $0xe8] sm:$0xff]
  %v753 = vld [vmem:[%s6 + $0xf0] sm:$0xff]
  %v754 = vld [vmem:[%s6 + $0xf8] sm:$0xff]
  %v755 = vld [vmem:[%s6 + $0x100] sm:$0xff]
  %v756 = vld [vmem:[%s6 + $0x108] sm:$0xff]
  %v757 = vld [vmem:[%s6 + $0x110] sm:$0xff]
  %v758 = vld [vmem:[%s6 + $0x118] sm:$0xff]
  %s759 = scalar_lea.vmem %s6, 288
  %v760 = vld [vmem:[%s759] sm:$0xff]
  %v761 = vld [vmem:[%s759 + $0x8] sm:$0xff]
  %v762 = vld [vmem:[%s759 + $0x10] sm:$0xff]
  %v763 = vld [vmem:[%s759 + $0x18] sm:$0xff]
  %v764 = vld [vmem:[%s759 + $0x20] sm:$0xff]
  %v765 = vld [vmem:[%s759 + $0x28] sm:$0xff]
  %v766 = vld [vmem:[%s759 + $0x30] sm:$0xff]
  %v767 = vld [vmem:[%s759 + $0x38] sm:$0xff]
  %v768 = vld [vmem:[%s759 + $0x40] sm:$0xff]
  %v769 = vld [vmem:[%s759 + $0x48] sm:$0xff]
  %v770 = vld [vmem:[%s759 + $0x50] sm:$0xff]
  %v771 = vld [vmem:[%s759 + $0x58] sm:$0xff]
  %v772 = vld [vmem:[%s759 + $0x60] sm:$0xff]
  %v773 = vld [vmem:[%s759 + $0x68] sm:$0xff]
  %v774 = vld [vmem:[%s759 + $0x70] sm:$0xff]
  %v775 = vld [vmem:[%s759 + $0x78] sm:$0xff]
  %v776 = vld [vmem:[%s759 + $0x80] sm:$0xff]
  %v777 = vld [vmem:[%s759 + $0x88] sm:$0xff]
  %v778 = vld [vmem:[%s759 + $0x90] sm:$0xff]
  %v779 = vld [vmem:[%s759 + $0x98] sm:$0xff]
  %v780 = vld [vmem:[%s759 + $0xa0] sm:$0xff]
  %v781 = vld [vmem:[%s759 + $0xa8] sm:$0xff]
  %v782 = vld [vmem:[%s759 + $0xb0] sm:$0xff]
  %v783 = vld [vmem:[%s759 + $0xb8] sm:$0xff]
  %v784 = vld [vmem:[%s759 + $0xc0] sm:$0xff]
  %v785 = vld [vmem:[%s759 + $0xc8] sm:$0xff]
  %v786 = vld [vmem:[%s759 + $0xd0] sm:$0xff]
  %v787 = vld [vmem:[%s759 + $0xd8] sm:$0xff]
  %v788 = vld [vmem:[%s759 + $0xe0] sm:$0xff]
  %v789 = vld [vmem:[%s759 + $0xe8] sm:$0xff]
  %v790 = vld [vmem:[%s759 + $0xf0] sm:$0xff]
  %v791 = vld [vmem:[%s759 + $0xf8] sm:$0xff]
  %v792 = vld [vmem:[%s759 + $0x100] sm:$0xff]
  %v793 = vld [vmem:[%s759 + $0x108] sm:$0xff]
  %v794 = vld [vmem:[%s759 + $0x110] sm:$0xff]
  %v795 = vld [vmem:[%s759 + $0x118] sm:$0xff]
  %v797 = vsel %vm70, %v722, 0
  %799 = vmatpush.msra.mxu0 %v790
  %800 = vmatpush.msra.mxu0 %v788
  %801 = vmatpush.msra.mxu0 %v786
  %802 = vmatpush.msra.mxu0 %v784
  %803 = vmatpush.msra.mxu0 %v782
  %804 = vmatpush.msra.mxu0 %v780
  %805 = vmatpush.msra.mxu0 %v778
  %806 = vmatpush.msra.mxu0 %v776
  %807 = vmatpush.msra.mxu0 %v774
  %808 = vmatpush.msra.mxu0 %v772
  %809 = vmatpush.msra.mxu0 %v770
  %810 = vmatpush.msra.mxu0 %v768
  %811 = vmatpush.msra.mxu0 %v766
  %812 = vmatpush.msra.mxu0 %v764
  %813 = vmatpush.msra.mxu0 %v762
  %814 = vmatpush.msra.mxu0 %v760
  %815 = vmatmul.f32.gmra.mxu0 %v721
  %v816 = vpop.f32.mrf.mxu0
  %v817 = vadd.f32 0.0, %v816
  %818 = vdwg.mxu0
  %819 = vmatpush.msra.mxu0 0.0
  %820 = vmatpush.msra.mxu0 0.0
  %821 = vmatpush.msra.mxu0 0.0
  %822 = vmatpush.msra.mxu0 0.0
  %823 = vmatpush.msra.mxu0 0.0
  %824 = vmatpush.msra.mxu0 0.0
  %825 = vmatpush.msra.mxu0 0.0
  %826 = vmatpush.msra.mxu0 0.0
  %827 = vmatpush.msra.mxu0 0.0
  %828 = vmatpush.msra.mxu0 0.0
  %829 = vmatpush.msra.mxu0 0.0
  %830 = vmatpush.msra.mxu0 0.0
  %831 = vmatpush.msra.mxu0 0.0
  %832 = vmatpush.msra.mxu0 0.0
  %833 = vmatpush.msra.mxu0 %v794
  %834 = vmatpush.msra.mxu0 %v792
  %835 = vmatmul.f32.gmra.mxu0 %v797
  %v836 = vpop.f32.mrf.mxu0
  %v837 = vadd.f32 %v817, %v836
  %838 = vdwg.mxu0
  %839 = vmatpush.msra.mxu0 %v791
  %840 = vmatpush.msra.mxu0 %v789
  %841 = vmatpush.msra.mxu0 %v787
  %842 = vmatpush.msra.mxu0 %v785
  %843 = vmatpush.msra.mxu0 %v783
  %844 = vmatpush.msra.mxu0 %v781
  %845 = vmatpush.msra.mxu0 %v779
  %846 = vmatpush.msra.mxu0 %v777
  %847 = vmatpush.msra.mxu0 %v775
  %848 = vmatpush.msra.mxu0 %v773
  %849 = vmatpush.msra.mxu0 %v771
  %850 = vmatpush.msra.mxu0 %v769
  %851 = vmatpush.msra.mxu0 %v767
  %852 = vmatpush.msra.mxu0 %v765
  %853 = vmatpush.msra.mxu0 %v763
  %854 = vmatpush.msra.mxu0 %v761
  %855 = vmatmul.f32.gmra.mxu0 %v721
  %v856 = vpop.f32.mrf.mxu0
  %v857 = vadd.f32 0.0, %v856
  %858 = vdwg.mxu0
  %859 = vmatpush.msra.mxu0 0.0
  %860 = vmatpush.msra.mxu0 0.0
  %861 = vmatpush.msra.mxu0 0.0
  %862 = vmatpush.msra.mxu0 0.0
  %863 = vmatpush.msra.mxu0 0.0
  %864 = vmatpush.msra.mxu0 0.0
  %865 = vmatpush.msra.mxu0 0.0
  %866 = vmatpush.msra.mxu0 0.0
  %867 = vmatpush.msra.mxu0 0.0
  %868 = vmatpush.msra.mxu0 0.0
  %869 = vmatpush.msra.mxu0 0.0
  %870 = vmatpush.msra.mxu0 0.0
  %871 = vmatpush.msra.mxu0 0.0
  %872 = vmatpush.msra.mxu0 0.0
  %873 = vmatpush.msra.mxu0 %v795
  %874 = vmatpush.msra.mxu0 %v793
  %875 = vmatmul.f32.gmra.mxu0 %v797
  %v876 = vpop.f32.mrf.mxu0
  %v877 = vadd.f32 %v857, %v876
  %878 = vdwg.mxu0
  %v880 = vsel %vm70, %v623, 0
  %882 = vmatpush.msra.mxu0 %v753
  %883 = vmatpush.msra.mxu0 %v751
  %884 = vmatpush.msra.mxu0 %v749
  %885 = vmatpush.msra.mxu0 %v747
  %886 = vmatpush.msra.mxu0 %v745
  %887 = vmatpush.msra.mxu0 %v743
  %888 = vmatpush.msra.mxu0 %v741
  %889 = vmatpush.msra.mxu0 %v739
  %890 = vmatpush.msra.mxu0 %v737
  %891 = vmatpush.msra.mxu0 %v735
  %892 = vmatpush.msra.mxu0 %v733
  %893 = vmatpush.msra.mxu0 %v731
  %894 = vmatpush.msra.mxu0 %v729
  %895 = vmatpush.msra.mxu0 %v727
  %896 = vmatpush.msra.mxu0 %v725
  %897 = vmatpush.msra.mxu0 %v723
  %898 = vmatmul.f32.gmra.mxu0 %v622
  %v899 = vpop.f32.mrf.mxu0
  %v900 = vadd.f32 %v837, %v899
  %901 = vdwg.mxu0
  %902 = vmatpush.msra.mxu0 0.0
  %903 = vmatpush.msra.mxu0 0.0
  %904 = vmatpush.msra.mxu0 0.0
  %905 = vmatpush.msra.mxu0 0.0
  %906 = vmatpush.msra.mxu0 0.0
  %907 = vmatpush.msra.mxu0 0.0
  %908 = vmatpush.msra.mxu0 0.0
  %909 = vmatpush.msra.mxu0 0.0
  %910 = vmatpush.msra.mxu0 0.0
  %911 = vmatpush.msra.mxu0 0.0
  %912 = vmatpush.msra.mxu0 0.0
  %913 = vmatpush.msra.mxu0 0.0
  %914 = vmatpush.msra.mxu0 0.0
  %915 = vmatpush.msra.mxu0 0.0
  %916 = vmatpush.msra.mxu0 %v757
  %917 = vmatpush.msra.mxu0 %v755
  %918 = vmatmul.f32.gmra.mxu0 %v880
  %v919 = vpop.f32.mrf.mxu0
  %v920 = vadd.f32 %v900, %v919
  %921 = vdwg.mxu0
  %922 = vmatpush.msra.mxu0 %v754
  %923 = vmatpush.msra.mxu0 %v752
  %924 = vmatpush.msra.mxu0 %v750
  %925 = vmatpush.msra.mxu0 %v748
  %926 = vmatpush.msra.mxu0 %v746
  %927 = vmatpush.msra.mxu0 %v744
  %928 = vmatpush.msra.mxu0 %v742
  %929 = vmatpush.msra.mxu0 %v740
  %930 = vmatpush.msra.mxu0 %v738
  %931 = vmatpush.msra.mxu0 %v736
  %932 = vmatpush.msra.mxu0 %v734
  %933 = vmatpush.msra.mxu0 %v732
  %934 = vmatpush.msra.mxu0 %v730
  %935 = vmatpush.msra.mxu0 %v728
  %936 = vmatpush.msra.mxu0 %v726
  %937 = vmatpush.msra.mxu0 %v724
  %938 = vmatmul.f32.gmra.mxu0 %v622
  %v939 = vpop.f32.mrf.mxu0
  %v940 = vadd.f32 %v877, %v939
  %941 = vdwg.mxu0
  %942 = vmatpush.msra.mxu0 0.0
  %943 = vmatpush.msra.mxu0 0.0
  %944 = vmatpush.msra.mxu0 0.0
  %945 = vmatpush.msra.mxu0 0.0
  %946 = vmatpush.msra.mxu0 0.0
  %947 = vmatpush.msra.mxu0 0.0
  %948 = vmatpush.msra.mxu0 0.0
  %949 = vmatpush.msra.mxu0 0.0
  %950 = vmatpush.msra.mxu0 0.0
  %951 = vmatpush.msra.mxu0 0.0
  %952 = vmatpush.msra.mxu0 0.0
  %953 = vmatpush.msra.mxu0 0.0
  %954 = vmatpush.msra.mxu0 0.0
  %955 = vmatpush.msra.mxu0 0.0
  %956 = vmatpush.msra.mxu0 %v758
  %957 = vmatpush.msra.mxu0 %v756
  %958 = vmatmul.f32.gmra.mxu0 %v880
  %v959 = vpop.f32.mrf.mxu0
  %v960 = vadd.f32 %v940, %v959
  %961 = vdwg.mxu0
  %v962 = vld [vmem:[%s8] sm:$0xff]
  %v963 = vld [vmem:[%s7] sm:$0xff]
  %v964 = vld [vmem:[%s7 + $0x8] sm:$0xff]
  %v965 = vld [vmem:[%s7 + $0x10] sm:$0xff]
  %v966 = vld [vmem:[%s7 + $0x18] sm:$0xff]
  %v967 = vld [vmem:[%s7 + $0x20] sm:$0xff]
  %v968 = vld [vmem:[%s7 + $0x28] sm:$0xff]
  %v969 = vld [vmem:[%s7 + $0x30] sm:$0xff]
  %v970 = vld [vmem:[%s7 + $0x38] sm:$0xff]
  %v971 = vld [vmem:[%s7 + $0x40] sm:$0xff]
  %v972 = vld [vmem:[%s7 + $0x48] sm:$0xff]
  %v973 = vld [vmem:[%s7 + $0x50] sm:$0xff]
  %v974 = vld [vmem:[%s7 + $0x58] sm:$0xff]
  %v975 = vld [vmem:[%s7 + $0x60] sm:$0xff]
  %v976 = vld [vmem:[%s7 + $0x68] sm:$0xff]
  %v977 = vld [vmem:[%s7 + $0x70] sm:$0xff]
  %v978 = vld [vmem:[%s7 + $0x78] sm:$0xff]
  %v979 = vld [vmem:[%s7 + $0x80] sm:$0xff]
  %v980 = vld [vmem:[%s7 + $0x88] sm:$0xff]
  %v981 = vld [vmem:[%s7 + $0x90] sm:$0xff]
  %v982 = vld [vmem:[%s7 + $0x98] sm:$0xff]
  %v983 = vld [vmem:[%s7 + $0xa0] sm:$0xff]
  %v984 = vld [vmem:[%s7 + $0xa8] sm:$0xff]
  %v985 = vld [vmem:[%s7 + $0xb0] sm:$0xff]
  %v986 = vld [vmem:[%s7 + $0xb8] sm:$0xff]
  %v987 = vld [vmem:[%s7 + $0xc0] sm:$0xff]
  %v988 = vld [vmem:[%s7 + $0xc8] sm:$0xff]
  %v989 = vld [vmem:[%s7 + $0xd0] sm:$0xff]
  %v990 = vld [vmem:[%s7 + $0xd8] sm:$0xff]
  %v991 = vld [vmem:[%s7 + $0xe0] sm:$0xff]
  %v992 = vld [vmem:[%s7 + $0xe8] sm:$0xff]
  %v993 = vld [vmem:[%s7 + $0xf0] sm:$0xff]
  %v994 = vld [vmem:[%s7 + $0xf8] sm:$0xff]
  %995 = vmatpush.msra.mxu0 %v978
  %996 = vmatpush.msra.mxu0 %v977
  %997 = vmatpush.msra.mxu0 %v976
  %998 = vmatpush.msra.mxu0 %v975
  %999 = vmatpush.msra.mxu0 %v974
  %1000 = vmatpush.msra.mxu0 %v973
  %1001 = vmatpush.msra.mxu0 %v972
  %1002 = vmatpush.msra.mxu0 %v971
  %1003 = vmatpush.msra.mxu0 %v970
  %1004 = vmatpush.msra.mxu0 %v969
  %1005 = vmatpush.msra.mxu0 %v968
  %1006 = vmatpush.msra.mxu0 %v967
  %1007 = vmatpush.msra.mxu0 %v966
  %1008 = vmatpush.msra.mxu0 %v965
  %1009 = vmatpush.msra.mxu0 %v964
  %1010 = vmatpush.msra.mxu0 %v963
  %1011 = vmatmul.f32.gmra.mxu0 %v234
  %v1012 = vpop.f32.mrf.mxu0
  %v1013 = vadd.f32 0.0, %v1012
  %1014 = vdwg.mxu0
  %1015 = vmatpush.msra.mxu0 %v994
  %1016 = vmatpush.msra.mxu0 %v993
  %1017 = vmatpush.msra.mxu0 %v992
  %1018 = vmatpush.msra.mxu0 %v991
  %1019 = vmatpush.msra.mxu0 %v990
  %1020 = vmatpush.msra.mxu0 %v989
  %1021 = vmatpush.msra.mxu0 %v988
  %1022 = vmatpush.msra.mxu0 %v987
  %1023 = vmatpush.msra.mxu0 %v986
  %1024 = vmatpush.msra.mxu0 %v985
  %1025 = vmatpush.msra.mxu0 %v984
  %1026 = vmatpush.msra.mxu0 %v983
  %1027 = vmatpush.msra.mxu0 %v982
  %1028 = vmatpush.msra.mxu0 %v981
  %1029 = vmatpush.msra.mxu0 %v980
  %1030 = vmatpush.msra.mxu0 %v979
  %1031 = vmatmul.f32.gmra.mxu0 %v235
  %v1032 = vpop.f32.mrf.mxu0
  %v1033 = vadd.f32 %v1013, %v1032
  %1034 = vdwg.mxu0
  %s1035 = scalar_lea.vmem %s8, 8
  %v1036 = vld [vmem:[%s1035] sm:$0xff]
  %s1037 = scalar_lea.vmem %s7, 256
  %v1038 = vld [vmem:[%s1037] sm:$0xff]
  %v1039 = vld [vmem:[%s1037 + $0x8] sm:$0xff]
  %v1040 = vld [vmem:[%s1037 + $0x10] sm:$0xff]
  %v1041 = vld [vmem:[%s1037 + $0x18] sm:$0xff]
  %v1042 = vld [vmem:[%s1037 + $0x20] sm:$0xff]
  %v1043 = vld [vmem:[%s1037 + $0x28] sm:$0xff]
  %v1044 = vld [vmem:[%s1037 + $0x30] sm:$0xff]
  %v1045 = vld [vmem:[%s1037 + $0x38] sm:$0xff]
  %v1046 = vld [vmem:[%s1037 + $0x40] sm:$0xff]
  %v1047 = vld [vmem:[%s1037 + $0x48] sm:$0xff]
  %v1048 = vld [vmem:[%s1037 + $0x50] sm:$0xff]
  %v1049 = vld [vmem:[%s1037 + $0x58] sm:$0xff]
  %v1050 = vld [vmem:[%s1037 + $0x60] sm:$0xff]
  %v1051 = vld [vmem:[%s1037 + $0x68] sm:$0xff]
  %v1052 = vld [vmem:[%s1037 + $0x70] sm:$0xff]
  %v1053 = vld [vmem:[%s1037 + $0x78] sm:$0xff]
  %v1054 = vld [vmem:[%s1037 + $0x80] sm:$0xff]
  %v1055 = vld [vmem:[%s1037 + $0x88] sm:$0xff]
  %v1056 = vld [vmem:[%s1037 + $0x90] sm:$0xff]
  %v1057 = vld [vmem:[%s1037 + $0x98] sm:$0xff]
  %v1058 = vld [vmem:[%s1037 + $0xa0] sm:$0xff]
  %v1059 = vld [vmem:[%s1037 + $0xa8] sm:$0xff]
  %v1060 = vld [vmem:[%s1037 + $0xb0] sm:$0xff]
  %v1061 = vld [vmem:[%s1037 + $0xb8] sm:$0xff]
  %v1062 = vld [vmem:[%s1037 + $0xc0] sm:$0xff]
  %v1063 = vld [vmem:[%s1037 + $0xc8] sm:$0xff]
  %v1064 = vld [vmem:[%s1037 + $0xd0] sm:$0xff]
  %v1065 = vld [vmem:[%s1037 + $0xd8] sm:$0xff]
  %v1066 = vld [vmem:[%s1037 + $0xe0] sm:$0xff]
  %v1067 = vld [vmem:[%s1037 + $0xe8] sm:$0xff]
  %v1068 = vld [vmem:[%s1037 + $0xf0] sm:$0xff]
  %v1069 = vld [vmem:[%s1037 + $0xf8] sm:$0xff]
  %1070 = vmatpush.msra.mxu0 %v1053
  %1071 = vmatpush.msra.mxu0 %v1052
  %1072 = vmatpush.msra.mxu0 %v1051
  %1073 = vmatpush.msra.mxu0 %v1050
  %1074 = vmatpush.msra.mxu0 %v1049
  %1075 = vmatpush.msra.mxu0 %v1048
  %1076 = vmatpush.msra.mxu0 %v1047
  %1077 = vmatpush.msra.mxu0 %v1046
  %1078 = vmatpush.msra.mxu0 %v1045
  %1079 = vmatpush.msra.mxu0 %v1044
  %1080 = vmatpush.msra.mxu0 %v1043
  %1081 = vmatpush.msra.mxu0 %v1042
  %1082 = vmatpush.msra.mxu0 %v1041
  %1083 = vmatpush.msra.mxu0 %v1040
  %1084 = vmatpush.msra.mxu0 %v1039
  %1085 = vmatpush.msra.mxu0 %v1038
  %1086 = vmatmul.f32.gmra.mxu0 %v234
  %v1087 = vpop.f32.mrf.mxu0
  %v1088 = vadd.f32 0.0, %v1087
  %1089 = vdwg.mxu0
  %1090 = vmatpush.msra.mxu0 %v1069
  %1091 = vmatpush.msra.mxu0 %v1068
  %1092 = vmatpush.msra.mxu0 %v1067
  %1093 = vmatpush.msra.mxu0 %v1066
  %1094 = vmatpush.msra.mxu0 %v1065
  %1095 = vmatpush.msra.mxu0 %v1064
  %1096 = vmatpush.msra.mxu0 %v1063
  %1097 = vmatpush.msra.mxu0 %v1062
  %1098 = vmatpush.msra.mxu0 %v1061
  %1099 = vmatpush.msra.mxu0 %v1060
  %1100 = vmatpush.msra.mxu0 %v1059
  %1101 = vmatpush.msra.mxu0 %v1058
  %1102 = vmatpush.msra.mxu0 %v1057
  %1103 = vmatpush.msra.mxu0 %v1056
  %1104 = vmatpush.msra.mxu0 %v1055
  %1105 = vmatpush.msra.mxu0 %v1054
  %1106 = vmatmul.f32.gmra.mxu0 %v235
  %v1107 = vpop.f32.mrf.mxu0
  %v1108 = vadd.f32 %v1088, %v1107
  %1109 = vdwg.mxu0
  %v1111 = vsel %vm528, %v1036, 0
  %1113 = vmatpush.msra.mxu0 0.0
  %1114 = vmatpush.msra.mxu0 0.0
  %1115 = vmatpush.msra.mxu0 0.0
  %1116 = vmatpush.msra.mxu0 0.0
  %1117 = vmatpush.msra.mxu0 0.0
  %1118 = vmatpush.msra.mxu0 0.0
  %1119 = vmatpush.msra.mxu0 0.0
  %1120 = vmatpush.msra.mxu0 0.0
  %1121 = vmatpush.msra.mxu0 0.0
  %1122 = vmatpush.msra.mxu0 0.0
  %1123 = vmatpush.msra.mxu0 0.0
  %1124 = vmatpush.msra.mxu0 0.0
  %1125 = vmatpush.msra.mxu0 0.0
  %1126 = vmatpush.msra.mxu0 0.0
  %1127 = vmatpush.msra.mxu0 0.0
  %1128 = vmatpush.msra.mxu0 %v1108
  %1129 = vmatmul.f32.gmra.mxu0 %v1111
  %v1130 = vpop.f32.mrf.mxu0
  %v1131 = vadd.f32 0.0, %v1130
  %1132 = vdwg.mxu0
  %v1134 = vsel %vm528, %v962, 0
  %1136 = vmatpush.msra.mxu0 0.0
  %1137 = vmatpush.msra.mxu0 0.0
  %1138 = vmatpush.msra.mxu0 0.0
  %1139 = vmatpush.msra.mxu0 0.0
  %1140 = vmatpush.msra.mxu0 0.0
  %1141 = vmatpush.msra.mxu0 0.0
  %1142 = vmatpush.msra.mxu0 0.0
  %1143 = vmatpush.msra.mxu0 0.0
  %1144 = vmatpush.msra.mxu0 0.0
  %1145 = vmatpush.msra.mxu0 0.0
  %1146 = vmatpush.msra.mxu0 0.0
  %1147 = vmatpush.msra.mxu0 0.0
  %1148 = vmatpush.msra.mxu0 0.0
  %1149 = vmatpush.msra.mxu0 0.0
  %1150 = vmatpush.msra.mxu0 0.0
  %1151 = vmatpush.msra.mxu0 %v1033
  %1152 = vmatmul.f32.gmra.mxu0 %v1134
  %v1153 = vpop.f32.mrf.mxu0
  %v1154 = vadd.f32 %v1131, %v1153
  %1155 = vdwg.mxu0
  %s1156 = scalar_lea.vmem %s8, 16
  %v1157 = vld [vmem:[%s1156] sm:$0xff]
  %s1158 = scalar_lea.vmem %s7, 512
  %v1159 = vld [vmem:[%s1158] sm:$0xff]
  %v1160 = vld [vmem:[%s1158 + $0x8] sm:$0xff]
  %v1161 = vld [vmem:[%s1158 + $0x10] sm:$0xff]
  %v1162 = vld [vmem:[%s1158 + $0x18] sm:$0xff]
  %v1163 = vld [vmem:[%s1158 + $0x20] sm:$0xff]
  %v1164 = vld [vmem:[%s1158 + $0x28] sm:$0xff]
  %v1165 = vld [vmem:[%s1158 + $0x30] sm:$0xff]
  %v1166 = vld [vmem:[%s1158 + $0x38] sm:$0xff]
  %v1167 = vld [vmem:[%s1158 + $0x40] sm:$0xff]
  %v1168 = vld [vmem:[%s1158 + $0x48] sm:$0xff]
  %v1169 = vld [vmem:[%s1158 + $0x50] sm:$0xff]
  %v1170 = vld [vmem:[%s1158 + $0x58] sm:$0xff]
  %v1171 = vld [vmem:[%s1158 + $0x60] sm:$0xff]
  %v1172 = vld [vmem:[%s1158 + $0x68] sm:$0xff]
  %v1173 = vld [vmem:[%s1158 + $0x70] sm:$0xff]
  %v1174 = vld [vmem:[%s1158 + $0x78] sm:$0xff]
  %v1175 = vld [vmem:[%s1158 + $0x80] sm:$0xff]
  %v1176 = vld [vmem:[%s1158 + $0x88] sm:$0xff]
  %v1177 = vld [vmem:[%s1158 + $0x90] sm:$0xff]
  %v1178 = vld [vmem:[%s1158 + $0x98] sm:$0xff]
  %v1179 = vld [vmem:[%s1158 + $0xa0] sm:$0xff]
  %v1180 = vld [vmem:[%s1158 + $0xa8] sm:$0xff]
  %v1181 = vld [vmem:[%s1158 + $0xb0] sm:$0xff]
  %v1182 = vld [vmem:[%s1158 + $0xb8] sm:$0xff]
  %v1183 = vld [vmem:[%s1158 + $0xc0] sm:$0xff]
  %v1184 = vld [vmem:[%s1158 + $0xc8] sm:$0xff]
  %v1185 = vld [vmem:[%s1158 + $0xd0] sm:$0xff]
  %v1186 = vld [vmem:[%s1158 + $0xd8] sm:$0xff]
  %v1187 = vld [vmem:[%s1158 + $0xe0] sm:$0xff]
  %v1188 = vld [vmem:[%s1158 + $0xe8] sm:$0xff]
  %v1189 = vld [vmem:[%s1158 + $0xf0] sm:$0xff]
  %v1190 = vld [vmem:[%s1158 + $0xf8] sm:$0xff]
  %1191 = vmatpush.msra.mxu0 %v1174
  %1192 = vmatpush.msra.mxu0 %v1173
  %1193 = vmatpush.msra.mxu0 %v1172
  %1194 = vmatpush.msra.mxu0 %v1171
  %1195 = vmatpush.msra.mxu0 %v1170
  %1196 = vmatpush.msra.mxu0 %v1169
  %1197 = vmatpush.msra.mxu0 %v1168
  %1198 = vmatpush.msra.mxu0 %v1167
  %1199 = vmatpush.msra.mxu0 %v1166
  %1200 = vmatpush.msra.mxu0 %v1165
  %1201 = vmatpush.msra.mxu0 %v1164
  %1202 = vmatpush.msra.mxu0 %v1163
  %1203 = vmatpush.msra.mxu0 %v1162
  %1204 = vmatpush.msra.mxu0 %v1161
  %1205 = vmatpush.msra.mxu0 %v1160
  %1206 = vmatpush.msra.mxu0 %v1159
  %1207 = vmatmul.f32.gmra.mxu0 %v234
  %v1208 = vpop.f32.mrf.mxu0
  %v1209 = vadd.f32 0.0, %v1208
  %1210 = vdwg.mxu0
  %1211 = vmatpush.msra.mxu0 %v1190
  %1212 = vmatpush.msra.mxu0 %v1189
  %1213 = vmatpush.msra.mxu0 %v1188
  %1214 = vmatpush.msra.mxu0 %v1187
  %1215 = vmatpush.msra.mxu0 %v1186
  %1216 = vmatpush.msra.mxu0 %v1185
  %1217 = vmatpush.msra.mxu0 %v1184
  %1218 = vmatpush.msra.mxu0 %v1183
  %1219 = vmatpush.msra.mxu0 %v1182
  %1220 = vmatpush.msra.mxu0 %v1181
  %1221 = vmatpush.msra.mxu0 %v1180
  %1222 = vmatpush.msra.mxu0 %v1179
  %1223 = vmatpush.msra.mxu0 %v1178
  %1224 = vmatpush.msra.mxu0 %v1177
  %1225 = vmatpush.msra.mxu0 %v1176
  %1226 = vmatpush.msra.mxu0 %v1175
  %1227 = vmatmul.f32.gmra.mxu0 %v235
  %v1228 = vpop.f32.mrf.mxu0
  %v1229 = vadd.f32 %v1209, %v1228
  %1230 = vdwg.mxu0
  %v1232 = vsel %vm528, %v1157, 0
  %1234 = vmatpush.msra.mxu0 0.0
  %1235 = vmatpush.msra.mxu0 0.0
  %1236 = vmatpush.msra.mxu0 0.0
  %1237 = vmatpush.msra.mxu0 0.0
  %1238 = vmatpush.msra.mxu0 0.0
  %1239 = vmatpush.msra.mxu0 0.0
  %1240 = vmatpush.msra.mxu0 0.0
  %1241 = vmatpush.msra.mxu0 0.0
  %1242 = vmatpush.msra.mxu0 0.0
  %1243 = vmatpush.msra.mxu0 0.0
  %1244 = vmatpush.msra.mxu0 0.0
  %1245 = vmatpush.msra.mxu0 0.0
  %1246 = vmatpush.msra.mxu0 0.0
  %1247 = vmatpush.msra.mxu0 0.0
  %1248 = vmatpush.msra.mxu0 0.0
  %1249 = vmatpush.msra.mxu0 %v1229
  %1250 = vmatmul.f32.gmra.mxu0 %v1232
  %v1251 = vpop.f32.mrf.mxu0
  %v1252 = vadd.f32 0.0, %v1251
  %1253 = vdwg.mxu0
  %v1254 = vadd.f32 %v1154, %v1252
  %s1255 = scalar_lea.vmem %s8, 24
  %v1256 = vld [vmem:[%s1255] sm:$0xff]
  %s1257 = scalar_lea.vmem %s7, 768
  %v1258 = vld [vmem:[%s1257] sm:$0xff]
  %v1259 = vld [vmem:[%s1257 + $0x8] sm:$0xff]
  %v1260 = vld [vmem:[%s1257 + $0x10] sm:$0xff]
  %v1261 = vld [vmem:[%s1257 + $0x18] sm:$0xff]
  %v1262 = vld [vmem:[%s1257 + $0x20] sm:$0xff]
  %v1263 = vld [vmem:[%s1257 + $0x28] sm:$0xff]
  %v1264 = vld [vmem:[%s1257 + $0x30] sm:$0xff]
  %v1265 = vld [vmem:[%s1257 + $0x38] sm:$0xff]
  %v1266 = vld [vmem:[%s1257 + $0x40] sm:$0xff]
  %v1267 = vld [vmem:[%s1257 + $0x48] sm:$0xff]
  %v1268 = vld [vmem:[%s1257 + $0x50] sm:$0xff]
  %v1269 = vld [vmem:[%s1257 + $0x58] sm:$0xff]
  %v1270 = vld [vmem:[%s1257 + $0x60] sm:$0xff]
  %v1271 = vld [vmem:[%s1257 + $0x68] sm:$0xff]
  %v1272 = vld [vmem:[%s1257 + $0x70] sm:$0xff]
  %v1273 = vld [vmem:[%s1257 + $0x78] sm:$0xff]
  %v1274 = vld [vmem:[%s1257 + $0x80] sm:$0xff]
  %v1275 = vld [vmem:[%s1257 + $0x88] sm:$0xff]
  %v1276 = vld [vmem:[%s1257 + $0x90] sm:$0xff]
  %v1277 = vld [vmem:[%s1257 + $0x98] sm:$0xff]
  %v1278 = vld [vmem:[%s1257 + $0xa0] sm:$0xff]
  %v1279 = vld [vmem:[%s1257 + $0xa8] sm:$0xff]
  %v1280 = vld [vmem:[%s1257 + $0xb0] sm:$0xff]
  %v1281 = vld [vmem:[%s1257 + $0xb8] sm:$0xff]
  %v1282 = vld [vmem:[%s1257 + $0xc0] sm:$0xff]
  %v1283 = vld [vmem:[%s1257 + $0xc8] sm:$0xff]
  %v1284 = vld [vmem:[%s1257 + $0xd0] sm:$0xff]
  %v1285 = vld [vmem:[%s1257 + $0xd8] sm:$0xff]
  %v1286 = vld [vmem:[%s1257 + $0xe0] sm:$0xff]
  %v1287 = vld [vmem:[%s1257 + $0xe8] sm:$0xff]
  %v1288 = vld [vmem:[%s1257 + $0xf0] sm:$0xff]
  %v1289 = vld [vmem:[%s1257 + $0xf8] sm:$0xff]
  %1290 = vmatpush.msra.mxu0 %v1273
  %1291 = vmatpush.msra.mxu0 %v1272
  %1292 = vmatpush.msra.mxu0 %v1271
  %1293 = vmatpush.msra.mxu0 %v1270
  %1294 = vmatpush.msra.mxu0 %v1269
  %1295 = vmatpush.msra.mxu0 %v1268
  %1296 = vmatpush.msra.mxu0 %v1267
  %1297 = vmatpush.msra.mxu0 %v1266
  %1298 = vmatpush.msra.mxu0 %v1265
  %1299 = vmatpush.msra.mxu0 %v1264
  %1300 = vmatpush.msra.mxu0 %v1263
  %1301 = vmatpush.msra.mxu0 %v1262
  %1302 = vmatpush.msra.mxu0 %v1261
  %1303 = vmatpush.msra.mxu0 %v1260
  %1304 = vmatpush.msra.mxu0 %v1259
  %1305 = vmatpush.msra.mxu0 %v1258
  %1306 = vmatmul.f32.gmra.mxu0 %v234
  %v1307 = vpop.f32.mrf.mxu0
  %v1308 = vadd.f32 0.0, %v1307
  %1309 = vdwg.mxu0
  %1310 = vmatpush.msra.mxu0 %v1289
  %1311 = vmatpush.msra.mxu0 %v1288
  %1312 = vmatpush.msra.mxu0 %v1287
  %1313 = vmatpush.msra.mxu0 %v1286
  %1314 = vmatpush.msra.mxu0 %v1285
  %1315 = vmatpush.msra.mxu0 %v1284
  %1316 = vmatpush.msra.mxu0 %v1283
  %1317 = vmatpush.msra.mxu0 %v1282
  %1318 = vmatpush.msra.mxu0 %v1281
  %1319 = vmatpush.msra.mxu0 %v1280
  %1320 = vmatpush.msra.mxu0 %v1279
  %1321 = vmatpush.msra.mxu0 %v1278
  %1322 = vmatpush.msra.mxu0 %v1277
  %1323 = vmatpush.msra.mxu0 %v1276
  %1324 = vmatpush.msra.mxu0 %v1275
  %1325 = vmatpush.msra.mxu0 %v1274
  %1326 = vmatmul.f32.gmra.mxu0 %v235
  %v1327 = vpop.f32.mrf.mxu0
  %v1328 = vadd.f32 %v1308, %v1327
  %1329 = vdwg.mxu0
  %v1331 = vsel %vm528, %v1256, 0
  %1333 = vmatpush.msra.mxu0 0.0
  %1334 = vmatpush.msra.mxu0 0.0
  %1335 = vmatpush.msra.mxu0 0.0
  %1336 = vmatpush.msra.mxu0 0.0
  %1337 = vmatpush.msra.mxu0 0.0
  %1338 = vmatpush.msra.mxu0 0.0
  %1339 = vmatpush.msra.mxu0 0.0
  %1340 = vmatpush.msra.mxu0 0.0
  %1341 = vmatpush.msra.mxu0 0.0
  %1342 = vmatpush.msra.mxu0 0.0
  %1343 = vmatpush.msra.mxu0 0.0
  %1344 = vmatpush.msra.mxu0 0.0
  %1345 = vmatpush.msra.mxu0 0.0
  %1346 = vmatpush.msra.mxu0 0.0
  %1347 = vmatpush.msra.mxu0 0.0
  %1348 = vmatpush.msra.mxu0 %v1328
  %1349 = vmatmul.f32.gmra.mxu0 %v1331
  %v1350 = vpop.f32.mrf.mxu0
  %v1351 = vadd.f32 0.0, %v1350
  %1352 = vdwg.mxu0
  %v1353 = vadd.f32 %v1254, %v1351
  %v1354 = vld [vmem:[%s9] sm:$0xff]
  %v1355 = vld [vmem:[%s9 + $0x8] sm:$0xff]
  %v1356 = vld [vmem:[%s9 + $0x10] sm:$0xff]
  %v1357 = vld [vmem:[%s9 + $0x18] sm:$0xff]
  %v1358 = vld [vmem:[%s9 + $0x20] sm:$0xff]
  %v1359 = vld [vmem:[%s9 + $0x28] sm:$0xff]
  %v1360 = vld [vmem:[%s9 + $0x30] sm:$0xff]
  %v1361 = vld [vmem:[%s9 + $0x38] sm:$0xff]
  %vm1362 = vcmask 523264
  %v1364 = vsel %vm1362, %v1353, 0
  %1366 = vmatpush.msra.mxu0 0.0
  %1367 = vmatpush.msra.mxu0 0.0
  %1368 = vmatpush.msra.mxu0 0.0
  %1369 = vmatpush.msra.mxu0 0.0
  %1370 = vmatpush.msra.mxu0 0.0
  %1371 = vmatpush.msra.mxu0 0.0
  %1372 = vmatpush.msra.mxu0 0.0
  %1373 = vmatpush.msra.mxu0 0.0
  %1374 = vmatpush.msra.mxu0 %v1361
  %1375 = vmatpush.msra.mxu0 %v1360
  %1376 = vmatpush.msra.mxu0 %v1359
  %1377 = vmatpush.msra.mxu0 %v1358
  %1378 = vmatpush.msra.mxu0 %v1357
  %1379 = vmatpush.msra.mxu0 %v1356
  %1380 = vmatpush.msra.mxu0 %v1355
  %1381 = vmatpush.msra.mxu0 %v1354
  %1382 = vmatmul.f32.gmra.mxu0 %v1364
  %v1383 = vpop.f32.mrf.mxu0
  %v1384 = vadd.f32 0.0, %v1383
  %1385 = vdwg.mxu0
  %s1386 = scalar_lea.vmem %s9, 64
  %v1387 = vld [vmem:[%s1386] sm:$0xff]
  %v1388 = vld [vmem:[%s1386 + $0x8] sm:$0xff]
  %v1389 = vld [vmem:[%s1386 + $0x10] sm:$0xff]
  %v1390 = vld [vmem:[%s1386 + $0x18] sm:$0xff]
  %v1391 = vld [vmem:[%s1386 + $0x20] sm:$0xff]
  %v1392 = vld [vmem:[%s1386 + $0x28] sm:$0xff]
  %v1393 = vld [vmem:[%s1386 + $0x30] sm:$0xff]
  %v1394 = vld [vmem:[%s1386 + $0x38] sm:$0xff]
  %1395 = vmatpush.msra.mxu0 0.0
  %1396 = vmatpush.msra.mxu0 0.0
  %1397 = vmatpush.msra.mxu0 0.0
  %1398 = vmatpush.msra.mxu0 0.0
  %1399 = vmatpush.msra.mxu0 0.0
  %1400 = vmatpush.msra.mxu0 0.0
  %1401 = vmatpush.msra.mxu0 0.0
  %1402 = vmatpush.msra.mxu0 0.0
  %1403 = vmatpush.msra.mxu0 %v1394
  %1404 = vmatpush.msra.mxu0 %v1393
  %1405 = vmatpush.msra.mxu0 %v1392
  %1406 = vmatpush.msra.mxu0 %v1391
  %1407 = vmatpush.msra.mxu0 %v1390
  %1408 = vmatpush.msra.mxu0 %v1389
  %1409 = vmatpush.msra.mxu0 %v1388
  %1410 = vmatpush.msra.mxu0 %v1387
  %1411 = vmatmul.f32.gmra.mxu0 %v1364
  %v1412 = vpop.f32.mrf.mxu0
  %v1413 = vadd.f32 0.0, %v1412
  %1414 = vdwg.mxu0
  %v1415 = vld [vmem:[%s10] sm:$0xff]
  %s1416 = scalar_lea.vmem %s10, 8
  %v1417 = vld [vmem:[%s1416] sm:$0xff]
  %v1419 = vsel %vm528, %v1417, 0
  %1421 = vmatpush.msra.mxu0 0.0
  %1422 = vmatpush.msra.mxu0 0.0
  %1423 = vmatpush.msra.mxu0 0.0
  %1424 = vmatpush.msra.mxu0 0.0
  %1425 = vmatpush.msra.mxu0 0.0
  %1426 = vmatpush.msra.mxu0 0.0
  %1427 = vmatpush.msra.mxu0 0.0
  %1428 = vmatpush.msra.mxu0 0.0
  %1429 = vmatpush.msra.mxu0 0.0
  %1430 = vmatpush.msra.mxu0 0.0
  %1431 = vmatpush.msra.mxu0 0.0
  %1432 = vmatpush.msra.mxu0 0.0
  %1433 = vmatpush.msra.mxu0 0.0
  %1434 = vmatpush.msra.mxu0 0.0
  %1435 = vmatpush.msra.mxu0 0.0
  %1436 = vmatpush.msra.mxu0 %v1413
  %1437 = vmatmul.f32.gmra.mxu0 %v1419
  %v1438 = vpop.f32.mrf.mxu0
  %v1439 = vadd.f32 0.0, %v1438
  %1440 = vdwg.mxu0
  %v1442 = vsel %vm528, %v1415, 0
  %1444 = vmatpush.msra.mxu0 0.0
  %1445 = vmatpush.msra.mxu0 0.0
  %1446 = vmatpush.msra.mxu0 0.0
  %1447 = vmatpush.msra.mxu0 0.0
  %1448 = vmatpush.msra.mxu0 0.0
  %1449 = vmatpush.msra.mxu0 0.0
  %1450 = vmatpush.msra.mxu0 0.0
  %1451 = vmatpush.msra.mxu0 0.0
  %1452 = vmatpush.msra.mxu0 0.0
  %1453 = vmatpush.msra.mxu0 0.0
  %1454 = vmatpush.msra.mxu0 0.0
  %1455 = vmatpush.msra.mxu0 0.0
  %1456 = vmatpush.msra.mxu0 0.0
  %1457 = vmatpush.msra.mxu0 0.0
  %1458 = vmatpush.msra.mxu0 0.0
  %1459 = vmatpush.msra.mxu0 %v1384
  %1460 = vmatmul.f32.gmra.mxu0 %v1442
  %v1461 = vpop.f32.mrf.mxu0
  %v1462 = vadd.f32 %v1439, %v1461
  %1463 = vdwg.mxu0
  %1465 = vset.pattern.permute.xlu0 0
  %1466 = vperm.xlu0 %1465, %v62
  %v1467 = vpop.permute.xlu0 %1466
  %v1469 = vadd.f32 %v1462, %v1467
  %v1470 = vmax.f32 %v1469, 0.0
  %s1471 = scalar_lea.vmem %s10, 16
  %v1472 = vld [vmem:[%s1471] sm:$0xff]
  %s1473 = scalar_lea.vmem %s10, 24
  %v1474 = vld [vmem:[%s1473] sm:$0xff]
  %v1476 = vsel %vm528, %v1474, 0
  %1478 = vmatpush.msra.mxu0 0.0
  %1479 = vmatpush.msra.mxu0 0.0
  %1480 = vmatpush.msra.mxu0 0.0
  %1481 = vmatpush.msra.mxu0 0.0
  %1482 = vmatpush.msra.mxu0 0.0
  %1483 = vmatpush.msra.mxu0 0.0
  %1484 = vmatpush.msra.mxu0 0.0
  %1485 = vmatpush.msra.mxu0 0.0
  %1486 = vmatpush.msra.mxu0 0.0
  %1487 = vmatpush.msra.mxu0 0.0
  %1488 = vmatpush.msra.mxu0 0.0
  %1489 = vmatpush.msra.mxu0 0.0
  %1490 = vmatpush.msra.mxu0 0.0
  %1491 = vmatpush.msra.mxu0 0.0
  %1492 = vmatpush.msra.mxu0 0.0
  %1493 = vmatpush.msra.mxu0 %v1413
  %1494 = vmatmul.f32.gmra.mxu0 %v1476
  %v1495 = vpop.f32.mrf.mxu0
  %v1496 = vadd.f32 0.0, %v1495
  %1497 = vdwg.mxu0
  %v1499 = vsel %vm528, %v1472, 0
  %1501 = vmatpush.msra.mxu0 0.0
  %1502 = vmatpush.msra.mxu0 0.0
  %1503 = vmatpush.msra.mxu0 0.0
  %1504 = vmatpush.msra.mxu0 0.0
  %1505 = vmatpush.msra.mxu0 0.0
  %1506 = vmatpush.msra.mxu0 0.0
  %1507 = vmatpush.msra.mxu0 0.0
  %1508 = vmatpush.msra.mxu0 0.0
  %1509 = vmatpush.msra.mxu0 0.0
  %1510 = vmatpush.msra.mxu0 0.0
  %1511 = vmatpush.msra.mxu0 0.0
  %1512 = vmatpush.msra.mxu0 0.0
  %1513 = vmatpush.msra.mxu0 0.0
  %1514 = vmatpush.msra.mxu0 0.0
  %1515 = vmatpush.msra.mxu0 0.0
  %1516 = vmatpush.msra.mxu0 %v1384
  %1517 = vmatmul.f32.gmra.mxu0 %v1499
  %v1518 = vpop.f32.mrf.mxu0
  %v1519 = vadd.f32 %v1496, %v1518
  %1520 = vdwg.mxu0
  %1522 = vset.pattern.permute.xlu0 0
  %1523 = vperm.xlu0 %1522, %v63
  %v1524 = vpop.permute.xlu0 %1523
  %v1526 = vadd.f32 %v1519, %v1524
  %v1527 = vmax.f32 %v1526, 0.0
  %v1528 = vld [vmem:[%s11] sm:$0xff]
  %v1529 = vld [vmem:[%s11 + $0x8] sm:$0xff]
  %v1530 = vld [vmem:[%s11 + $0x10] sm:$0xff]
  %v1531 = vld [vmem:[%s11 + $0x18] sm:$0xff]
  %v1532 = vld [vmem:[%s11 + $0x20] sm:$0xff]
  %v1533 = vld [vmem:[%s11 + $0x28] sm:$0xff]
  %v1534 = vld [vmem:[%s11 + $0x30] sm:$0xff]
  %v1535 = vld [vmem:[%s11 + $0x38] sm:$0xff]
  %v1536 = vld [vmem:[%s11 + $0x40] sm:$0xff]
  %v1537 = vld [vmem:[%s11 + $0x48] sm:$0xff]
  %s1538 = scalar_lea.vmem %s11, 80
  %v1539 = vld [vmem:[%s1538] sm:$0xff]
  %v1540 = vld [vmem:[%s1538 + $0x8] sm:$0xff]
  %v1541 = vld [vmem:[%s1538 + $0x10] sm:$0xff]
  %v1542 = vld [vmem:[%s1538 + $0x18] sm:$0xff]
  %v1543 = vld [vmem:[%s1538 + $0x20] sm:$0xff]
  %v1544 = vld [vmem:[%s1538 + $0x28] sm:$0xff]
  %v1545 = vld [vmem:[%s1538 + $0x30] sm:$0xff]
  %v1546 = vld [vmem:[%s1538 + $0x38] sm:$0xff]
  %v1547 = vld [vmem:[%s1538 + $0x40] sm:$0xff]
  %v1548 = vld [vmem:[%s1538 + $0x48] sm:$0xff]
  %vm1549 = vcmask 326656
  %v1551 = vsel %vm1549, %v1527, 0
  %1553 = vmatpush.msra.mxu0 0.0
  %1554 = vmatpush.msra.mxu0 0.0
  %1555 = vmatpush.msra.mxu0 0.0
  %1556 = vmatpush.msra.mxu0 0.0
  %1557 = vmatpush.msra.mxu0 0.0
  %1558 = vmatpush.msra.mxu0 0.0
  %1559 = vmatpush.msra.mxu0 0.0
  %1560 = vmatpush.msra.mxu0 0.0
  %1561 = vmatpush.msra.mxu0 0.0
  %1562 = vmatpush.msra.mxu0 0.0
  %1563 = vmatpush.msra.mxu0 0.0
  %1564 = vmatpush.msra.mxu0 %v1547
  %1565 = vmatpush.msra.mxu0 %v1545
  %1566 = vmatpush.msra.mxu0 %v1543
  %1567 = vmatpush.msra.mxu0 %v1541
  %1568 = vmatpush.msra.mxu0 %v1539
  %1569 = vmatmul.f32.gmra.mxu0 %v1551
  %v1570 = vpop.f32.mrf.mxu0
  %v1571 = vadd.f32 0.0, %v1570
  %1572 = vdwg.mxu0
  %1573 = vmatpush.msra.mxu0 0.0
  %1574 = vmatpush.msra.mxu0 0.0
  %1575 = vmatpush.msra.mxu0 0.0
  %1576 = vmatpush.msra.mxu0 0.0
  %1577 = vmatpush.msra.mxu0 0.0
  %1578 = vmatpush.msra.mxu0 0.0
  %1579 = vmatpush.msra.mxu0 0.0
  %1580 = vmatpush.msra.mxu0 0.0
  %1581 = vmatpush.msra.mxu0 0.0
  %1582 = vmatpush.msra.mxu0 0.0
  %1583 = vmatpush.msra.mxu0 0.0
  %1584 = vmatpush.msra.mxu0 %v1548
  %1585 = vmatpush.msra.mxu0 %v1546
  %1586 = vmatpush.msra.mxu0 %v1544
  %1587 = vmatpush.msra.mxu0 %v1542
  %1588 = vmatpush.msra.mxu0 %v1540
  %1589 = vmatmul.f32.gmra.mxu0 %v1551
  %v1590 = vpop.f32.mrf.mxu0
  %v1591 = vadd.f32 0.0, %v1590
  %1592 = vdwg.mxu0
  %v1594 = vsel %vm1549, %v1470, 0
  %1596 = vmatpush.msra.mxu0 0.0
  %1597 = vmatpush.msra.mxu0 0.0
  %1598 = vmatpush.msra.mxu0 0.0
  %1599 = vmatpush.msra.mxu0 0.0
  %1600 = vmatpush.msra.mxu0 0.0
  %1601 = vmatpush.msra.mxu0 0.0
  %1602 = vmatpush.msra.mxu0 0.0
  %1603 = vmatpush.msra.mxu0 0.0
  %1604 = vmatpush.msra.mxu0 0.0
  %1605 = vmatpush.msra.mxu0 0.0
  %1606 = vmatpush.msra.mxu0 0.0
  %1607 = vmatpush.msra.mxu0 %v1536
  %1608 = vmatpush.msra.mxu0 %v1534
  %1609 = vmatpush.msra.mxu0 %v1532
  %1610 = vmatpush.msra.mxu0 %v1530
  %1611 = vmatpush.msra.mxu0 %v1528
  %1612 = vmatmul.f32.gmra.mxu0 %v1594
  %v1613 = vpop.f32.mrf.mxu0
  %v1614 = vadd.f32 %v1571, %v1613
  %1615 = vdwg.mxu0
  %1616 = vmatpush.msra.mxu0 0.0
  %1617 = vmatpush.msra.mxu0 0.0
  %1618 = vmatpush.msra.mxu0 0.0
  %1619 = vmatpush.msra.mxu0 0.0
  %1620 = vmatpush.msra.mxu0 0.0
  %1621 = vmatpush.msra.mxu0 0.0
  %1622 = vmatpush.msra.mxu0 0.0
  %1623 = vmatpush.msra.mxu0 0.0
  %1624 = vmatpush.msra.mxu0 0.0
  %1625 = vmatpush.msra.mxu0 0.0
  %1626 = vmatpush.msra.mxu0 0.0
  %1627 = vmatpush.msra.mxu0 %v1537
  %1628 = vmatpush.msra.mxu0 %v1535
  %1629 = vmatpush.msra.mxu0 %v1533
  %1630 = vmatpush.msra.mxu0 %v1531
  %1631 = vmatpush.msra.mxu0 %v1529
  %1632 = vmatmul.f32.gmra.mxu0 %v1594
  %v1633 = vpop.f32.mrf.mxu0
  %v1634 = vadd.f32 %v1591, %v1633
  %1635 = vdwg.mxu0
  %v1636 = vadd.f32 %v234, %v920
  %v1637 = vadd.f32 %v235, %v960
  %v1638 = vadd.f32 %v1636, %v1614
  %v1639 = vadd.f32 %v1637, %v1634
  %v1640 = vld [vmem:[%s12] sm:$0xff]
  %v1641 = vld [vmem:[%s12 + $0x8] sm:$0xff]
  %v1643 = vsel %vm528, %v1640, 0
  %v1646 = vsel %vm528, %v1641, 0
  %1648 = vmatpush.msra.mxu0 0.0
  %1649 = vmatpush.msra.mxu0 0.0
  %1650 = vmatpush.msra.mxu0 0.0
  %1651 = vmatpush.msra.mxu0 0.0
  %1652 = vmatpush.msra.mxu0 0.0
  %1653 = vmatpush.msra.mxu0 0.0
  %1654 = vmatpush.msra.mxu0 0.0
  %1655 = vmatpush.msra.mxu0 0.0
  %1656 = vmatpush.msra.mxu0 0.0
  %1657 = vmatpush.msra.mxu0 0.0
  %1658 = vmatpush.msra.mxu0 0.0
  %1659 = vmatpush.msra.mxu0 0.0
  %1660 = vmatpush.msra.mxu0 0.0
  %1661 = vmatpush.msra.mxu0 0.0
  %1662 = vmatpush.msra.mxu0 0.0
  %1663 = vmatpush.msra.mxu0 %v1638
  %1664 = vmatmul.f32.gmra.mxu0 %v1643
  %v1665 = vpop.f32.mrf.mxu0
  %v1666 = vadd.f32 0.0, %v1665
  %1667 = vmatmul.f32.gmra.mxu0 %v1646
  %v1668 = vpop.f32.mrf.mxu0
  %v1669 = vadd.f32 0.0, %v1668
  %1670 = vdwg.mxu0
  %1671 = vmatpush.msra.mxu0 0.0
  %1672 = vmatpush.msra.mxu0 0.0
  %1673 = vmatpush.msra.mxu0 0.0
  %1674 = vmatpush.msra.mxu0 0.0
  %1675 = vmatpush.msra.mxu0 0.0
  %1676 = vmatpush.msra.mxu0 0.0
  %1677 = vmatpush.msra.mxu0 0.0
  %1678 = vmatpush.msra.mxu0 0.0
  %1679 = vmatpush.msra.mxu0 0.0
  %1680 = vmatpush.msra.mxu0 0.0
  %1681 = vmatpush.msra.mxu0 0.0
  %1682 = vmatpush.msra.mxu0 0.0
  %1683 = vmatpush.msra.mxu0 0.0
  %1684 = vmatpush.msra.mxu0 0.0
  %1685 = vmatpush.msra.mxu0 0.0
  %1686 = vmatpush.msra.mxu0 %v1639
  %1687 = vmatmul.f32.gmra.mxu0 %v1643
  %v1688 = vpop.f32.mrf.mxu0
  %v1689 = vadd.f32 0.0, %v1688
  %1690 = vmatmul.f32.gmra.mxu0 %v1646
  %v1691 = vpop.f32.mrf.mxu0
  %v1692 = vadd.f32 0.0, %v1691
  %1693 = vdwg.mxu0
  %v1694 = vadd.f32 %v107, %v1666
  %v1695 = vadd.f32 %v136, %v1689
  %v1696 = vadd.f32 %v110, %v1669
  %v1697 = vadd.f32 %v139, %v1692
  %1699 = vset.pattern.permute.xlu0 0
  %1700 = vperm.xlu0 %1699, %v64
  %v1701 = vpop.permute.xlu0 %1700
  %1704 = vset.pattern.permute.xlu0 0
  %1705 = vperm.xlu0 %1704, %v65
  %v1706 = vpop.permute.xlu0 %1705
  %v1708 = vadd.f32 %v1694, %v1701
  %v1709 = vadd.f32 %v1695, %v1701
  %v1710 = vadd.f32 %v1696, %v1706
  %v1711 = vadd.f32 %v1697, %v1706
  %1712 = vst [vmem:[%s15] sm:$0xff] %v1708
  %1713 = vst [vmem:[%s15 + $0x8] sm:$0xff] %v1709
  %1714 = vst [vmem:[%s15 + $0x10] sm:$0xff] %v1710
  %1715 = vst [vmem:[%s15 + $0x18] sm:$0xff] %v1711
  // Predicated region
  $region58: #{ffc_bn_act_forward.1} parent=0 // pred_check
    _
  $region59: #{ffc_bn_act_forward.1} parent=0 // pred_check_branch
    %1717 = sbr.rel (0) target = $region61
  $region60: #{ffc_bn_act_forward.1} parent=0 // pred_region
    _
  $region61: #{ffc_bn_act_forward.1} parent=0 // pred_fallthru
    _
  // Predicated region
  $region62: #{ffc_bn_act_forward.1} parent=0 // pred_check
    _
  $region63: #{ffc_bn_act_forward.1} parent=0 // pred_check_branch
    %1719 = sbr.rel (0) target = $region65
  $region64: #{ffc_bn_act_forward.1} parent=0 // pred_region
    _
  $region65: #{ffc_bn_act_forward.1} parent=0 // pred_fallthru
    _
  // Predicated region
  $region66: #{ffc_bn_act_forward.1} parent=0 // pred_check
    _
  $region67: #{ffc_bn_act_forward.1} parent=0 // pred_check_branch
    %1721 = sbr.rel (0) target = $region69
  $region68: #{ffc_bn_act_forward.1} parent=0 // pred_region
    _
  $region69: #{ffc_bn_act_forward.1} parent=0 // pred_fallthru
    _
  // Predicated region
  $region70: #{ffc_bn_act_forward.1} parent=0 // pred_check
    _
  $region71: #{ffc_bn_act_forward.1} parent=0 // pred_check_branch
    %1723 = sbr.rel (0) target = $region73
  $region72: #{ffc_bn_act_forward.1} parent=0 // pred_region
    _
  $region73: #{ffc_bn_act_forward.1} parent=0 // pred_fallthru
    _

</llo_original>
